<compile_context>
chip_gen: v6e
topology: v6e:2x2x1
jax: 0.10.0
libtpu: 0.0.40
codegen_flags: <defaults>
</compile_context>

<pallas_src>
import numpy as np
import jax
import jax.numpy as jnp
from jax import lax
from jax.experimental import pallas as pl
from jax.experimental.pallas import tpu as pltpu


def _round_up(x, m):
    return (x + m - 1) // m * m


# ----------------------------- Pallas kernel ---------------------------------
def _decoder_kernel(ids_ref, h_ref, enc_ref, emb_ref,
                    w_ih_ref, w_hh_ref, b_i_ref, b_h_ref,
                    w_cat_h_ref, w_cat_c_ref, b_cat_ref,
                    w_out_ref, b_out_ref,
                    logp_ref, hnew_ref):
    f32 = jnp.float32
    Bp, Hp = h_ref.shape
    Vemb = emb_ref.shape[0]

    # --- embedding lookup as one-hot @ table (MXU), avoids an XLA gather per step ---
    # TODO(synk): at large vocab sizes, switch to a scalar-prefetch row-gather DMA
    # instead of keeping the whole embedding table resident + one-hot matmul.
    ids = ids_ref[...]                                              # (Bp, 1) int32
    col = lax.broadcasted_iota(jnp.int32, (Bp, Vemb), 1)
    onehot = (col == ids).astype(f32)                               # (Bp, Vemb)
    x = jnp.dot(onehot, emb_ref[...], preferred_element_type=f32)   # (Bp, Hp)

    h = h_ref[...]                                                  # (Bp, Hp)

    # --- GRU cell: two fused (Hp, 3Hp) matmuls, PyTorch gate order (r, z, n) ---
    # Gate slices are at vreg lane boundaries (multiples of 128) -> free slicing.
    gi = jnp.dot(x, w_ih_ref[...], preferred_element_type=f32) + b_i_ref[...]   # (Bp, 3Hp)
    gh = jnp.dot(h, w_hh_ref[...], preferred_element_type=f32) + b_h_ref[...]   # (Bp, 3Hp)
    r = jax.nn.sigmoid(gi[:, 0:Hp] + gh[:, 0:Hp])
    z = jax.nn.sigmoid(gi[:, Hp:2 * Hp] + gh[:, Hp:2 * Hp])
    n = jnp.tanh(gi[:, 2 * Hp:3 * Hp] + r * gh[:, 2 * Hp:3 * Hp])
    h_new = (1.0 - z) * n + z * h                                   # (Bp, Hp)
    hnew_ref[...] = h_new                                           # lane-dense store

    # --- 'dot' attention over encoder outputs, batched matmuls on the MXU ---
    enc = enc_ref[...]                                              # (Bp, S, Hp)
    scores = jnp.einsum('bqh,bsh->bqs', h_new[:, None, :], enc,
                        preferred_element_type=f32)                 # (Bp, 1, S)
    m = jnp.max(scores, axis=-1, keepdims=True)
    e = jnp.exp(scores - m)
    attn = e * pl.reciprocal(jnp.sum(e, axis=-1, keepdims=True), approx=True)
    context = jnp.einsum('bqs,bsh->bqh', attn, enc,
                         preferred_element_type=f32)[:, 0, :]       # (Bp, Hp)

    # --- concat-free Linear(2H -> H) + tanh: split weight, two dots ---
    concat_out = jnp.tanh(
        jnp.dot(h_new, w_cat_h_ref[...], preferred_element_type=f32)
        + jnp.dot(context, w_cat_c_ref[...], preferred_element_type=f32)
        + b_cat_ref[...])                                           # (Bp, Hp)

    # --- output projection (V padded to x128, lane-dense store) + LogSoftmax(dim=1) ---
    logits = jnp.dot(concat_out, w_out_ref[...],
                     preferred_element_type=f32) + b_out_ref[...]   # (Bp, Vp)
    lm = jnp.max(logits, axis=1, keepdims=True)
    shifted = logits - lm
    lse = jnp.log(jnp.sum(jnp.exp(shifted), axis=1, keepdims=True))
    logp_ref[...] = shifted - lse


# ---------------------- one-time weight preprocessing --------------------------
def prepare_params(params):
    """Hoisted out of the per-step path: transposes, gate fusion, zero-padding to
    lane-dense (multiple-of-128) widths."""
    V, H = params["embedding"].shape
    Hp = _round_up(H, 128)                      # lane-dense hidden width
    Vp = _round_up(V, 128)                      # lane-dense output width

    emb_p = jnp.zeros((V, Hp), jnp.float32).at[:, :H].set(
        params["embedding"].astype(jnp.float32))

    def pad_gru(w, b):
        # PyTorch layout: w (3H, H) rows ordered (r, z, n); re-pack to (Hp, 3Hp) with
        # each gate occupying a 128-aligned column block, zero padding elsewhere.
        wp = jnp.zeros((Hp, 3 * Hp), jnp.float32)
        bp = jnp.zeros((1, 3 * Hp), jnp.float32)
        for g in range(3):
            wp = wp.at[:H, g * Hp:g * Hp + H].set(w[g * H:(g + 1) * H, :].T)
            bp = bp.at[0, g * Hp:g * Hp + H].set(b[g * H:(g + 1) * H])
        return wp, bp

    w_ih_p, b_i_p = pad_gru(params["gru_w_ih"], params["gru_b_ih"])
    w_hh_p, b_h_p = pad_gru(params["gru_w_hh"], params["gru_b_hh"])

    w_cat_h = jnp.zeros((Hp, Hp), jnp.float32).at[:H, :H].set(
        params["w_concat"][:, :H].T)            # acts on h_new
    w_cat_c = jnp.zeros((Hp, Hp), jnp.float32).at[:H, :H].set(
        params["w_concat"][:, H:].T)            # acts on context
    b_cat = jnp.zeros((1, Hp), jnp.float32).at[0, :H].set(params["b_concat"])

    # Pad vocab dim: zero weight columns, -1e30 bias -> padded logits vanish in softmax.
    w_out_p = jnp.zeros((Hp, Vp), jnp.float32).at[:H, :V].set(params["w_out"].T)
    b_out_p = jnp.full((1, Vp), -1e30, jnp.float32).at[0, :V].set(params["b_out"])

    return {
        "H": H, "Hp": Hp, "V": V, "Vp": Vp,
        "embedding": emb_p,
        "w_ih": w_ih_p, "w_hh": w_hh_p, "b_i": b_i_p, "b_h": b_h_p,
        "w_cat_h": w_cat_h, "w_cat_c": w_cat_c, "b_cat": b_cat,
        "w_out": w_out_p, "b_out": b_out_p,
    }


# ------------------------------ per-step wrapper --------------------------------
def luong_attn_decoder_step(prep, input_seq, last_hidden, encoder_outputs):
    """Mirrors LuongAttnDecoderRNN.forward with attn_model='dot' (eval mode)."""
    B = input_seq.shape[0]
    S = encoder_outputs.shape[1]
    H, Hp, V, Vp = prep["H"], prep["Hp"], prep["V"], prep["Vp"]
    Bp = _round_up(max(B, 8), 8)                # sublane-aligned batch

    ids_p = jnp.zeros((Bp, 1), jnp.int32).at[:B, 0].set(input_seq.astype(jnp.int32))
    h0_p = jnp.zeros((Bp, Hp), jnp.float32).at[:B, :H].set(last_hidden[0])
    enc_p = jnp.zeros((Bp, S, Hp), jnp.float32).at[:B, :, :H].set(encoder_outputs)

    vmem = pl.BlockSpec(memory_space=pltpu.MemorySpace.VMEM)
    logp_p, hnew_p = pl.pallas_call(
        _decoder_kernel,
        out_shape=(jax.ShapeDtypeStruct((Bp, Vp), jnp.float32),
                   jax.ShapeDtypeStruct((Bp, Hp), jnp.float32)),
        in_specs=[vmem] * 13,
        out_specs=(vmem, vmem),
    )(ids_p, h0_p, enc_p, prep["embedding"],
      prep["w_ih"], prep["w_hh"], prep["b_i"], prep["b_h"],
      prep["w_cat_h"], prep["w_cat_c"], prep["b_cat"],
      prep["w_out"], prep["b_out"])

    return logp_p[:B, :V], hnew_p[:B, :H][None]     # hidden: (1, B, H)


# --------------------------- pure-JAX reference ----------------------------------
def reference_forward(input_seq, last_hidden, encoder_outputs, params):
    emb = params["embedding"][input_seq]
    h = last_hidden[0]
    gi = emb @ params["gru_w_ih"].T + params["gru_b_ih"]
    gh = h @ params["gru_w_hh"].T + params["gru_b_hh"]
    i_r, i_z, i_n = jnp.split(gi, 3, axis=1)
    h_r, h_z, h_n = jnp.split(gh, 3, axis=1)
    r = jax.nn.sigmoid(i_r + h_r)
    z = jax.nn.sigmoid(i_z + h_z)
    n = jnp.tanh(i_n + r * h_n)
    h_new = (1 - z) * n + z * h
    scores = jnp.einsum("bh,bsh->bs", h_new, encoder_outputs)
    attn = jax.nn.softmax(scores, axis=1)
    context = jnp.einsum("bs,bsh->bh", attn, encoder_outputs)
    concat_in = jnp.concatenate([h_new, context], axis=1)
    concat_out = jnp.tanh(concat_in @ params["w_concat"].T + params["b_concat"])
    logits = concat_out @ params["w_out"].T + params["b_out"]
    logp = jax.nn.log_softmax(logits, axis=1)
    return logp, h_new[None]


# --------------------------------- main -------------------------------------------
if __name__ == "__main__":
    B, H, S, V = 2, 32, 8, 64          # batch, hidden_size, encoder seq len, output_size
    PAD_TOKEN = 0

    key = jax.random.PRNGKey(0)
    ks = jax.random.split(key, 12)
    bound = 1.0 / np.sqrt(H)

    emb_table = jax.random.normal(ks[0], (V, H), jnp.float32)
    emb_table = emb_table.at[PAD_TOKEN].set(0.0)         # padding_idx=0 -> zero row

    params = {
        "embedding": emb_table,
        "gru_w_ih": jax.random.uniform(ks[1], (3 * H, H), jnp.float32, -bound, bound),
        "gru_w_hh": jax.random.uniform(ks[2], (3 * H, H), jnp.float32, -bound, bound),
        "gru_b_ih": jax.random.uniform(ks[3], (3 * H,), jnp.float32, -bound, bound),
        "gru_b_hh": jax.random.uniform(ks[4], (3 * H,), jnp.float32, -bound, bound),
        "w_concat": jax.random.uniform(ks[5], (H, 2 * H), jnp.float32, -bound, bound),
        "b_concat": jax.random.uniform(ks[6], (H,), jnp.float32, -bound, bound),
        "w_out": jax.random.uniform(ks[7], (V, H), jnp.float32, -bound, bound),
        "b_out": jax.random.uniform(ks[8], (V,), jnp.float32, -bound, bound),
    }

    input_seq = jax.random.randint(ks[9], (B,), 1, V, dtype=jnp.int32)
    last_hidden = jax.random.normal(ks[10], (1, B, H), jnp.float32)
    encoder_outputs = jax.random.normal(ks[11], (B, S, H), jnp.float32)

    prep = prepare_params(params)                        # one-time weight prep

    # Jit the per-step path (activation padding + pallas_call) as one executable.
    step_fn = jax.jit(lambda ids, h, enc: luong_attn_decoder_step(prep, ids, h, enc))
    logp, hidden = step_fn(input_seq, last_hidden, encoder_outputs)
    jax.block_until_ready((logp, hidden))

    ref_logp, ref_hidden = reference_forward(input_seq, last_hidden, encoder_outputs, params)
    assert logp.shape == (B, V) and hidden.shape == (1, B, H)
    # hidden state does not go through the approx reciprocal -> tight tolerance
    np.testing.assert_allclose(np.asarray(hidden), np.asarray(ref_hidden), rtol=1e-5, atol=1e-5)
    # log-probs pass through pl.reciprocal(approx=True) in the attention softmax
    np.testing.assert_allclose(np.asarray(logp), np.asarray(ref_logp), rtol=2e-3, atol=2e-3)

    print("KERNEL_OK")
</pallas_src>

<mosaic_0001>
module attributes {stable_mosaic.version = 11 : i64} {
  func.func @_decoder_kernel(%arg0: memref<8x1xi32, #tpu.memory_space<vmem>>, %arg1: memref<8x128xf32, #tpu.memory_space<vmem>>, %arg2: memref<8x8x128xf32, #tpu.memory_space<vmem>>, %arg3: memref<64x128xf32, #tpu.memory_space<vmem>>, %arg4: memref<128x384xf32, #tpu.memory_space<vmem>>, %arg5: memref<128x384xf32, #tpu.memory_space<vmem>>, %arg6: memref<1x384xf32, #tpu.memory_space<vmem>>, %arg7: memref<1x384xf32, #tpu.memory_space<vmem>>, %arg8: memref<128x128xf32, #tpu.memory_space<vmem>>, %arg9: memref<128x128xf32, #tpu.memory_space<vmem>>, %arg10: memref<1x128xf32, #tpu.memory_space<vmem>>, %arg11: memref<128x128xf32, #tpu.memory_space<vmem>>, %arg12: memref<1x128xf32, #tpu.memory_space<vmem>>, %arg13: memref<8x128xf32, #tpu.memory_space<vmem>>, %arg14: memref<8x128xf32, #tpu.memory_space<vmem>>) attributes {dimension_semantics = [], scalar_prefetch = 0 : i64, scratch_operands = 0 : i64, tpu.core_type = #tpu.core_type<tc>} {
    %c0 = arith.constant 0 : index
    %c0_0 = arith.constant 0 : index
    %0 = vector.load %arg0[%c0, %c0_0] : memref<8x1xi32, #tpu.memory_space<vmem>>, vector<8x1xi32>
    %1 = tpu.iota {dimensions = array<i32: 1>} : vector<8x64xi32>
    %2 = vector.broadcast %0 : vector<8x1xi32> to vector<8x64xi32>
    %3 = arith.cmpi eq, %1, %2 : vector<8x64xi32>
    %4 = arith.extui %3 : vector<8x64xi1> to vector<8x64xi32>
    %5 = arith.sitofp %4 : vector<8x64xi32> to vector<8x64xf32>
    %c0_1 = arith.constant 0 : index
    %c0_2 = arith.constant 0 : index
    %6 = vector.load %arg3[%c0_1, %c0_2] : memref<64x128xf32, #tpu.memory_space<vmem>>, vector<64x128xf32>
    %cst = arith.constant dense<0.000000e+00> : vector<8x128xf32>
    %7 = tpu.matmul %5, %6, %cst {dimension_numbers = #tpu.dot_dimension_numbers<[1], [0], [0], [1], [0, 0, 1, 1], [], []>} : vector<8x64xf32>, vector<64x128xf32>, vector<8x128xf32> -> vector<8x128xf32>
    %c0_3 = arith.constant 0 : index
    %c0_4 = arith.constant 0 : index
    %8 = vector.load %arg1[%c0_3, %c0_4] : memref<8x128xf32, #tpu.memory_space<vmem>>, vector<8x128xf32>
    %c0_5 = arith.constant 0 : index
    %c0_6 = arith.constant 0 : index
    %9 = vector.load %arg4[%c0_5, %c0_6] : memref<128x384xf32, #tpu.memory_space<vmem>>, vector<128x384xf32>
    %cst_7 = arith.constant dense<0.000000e+00> : vector<8x384xf32>
    %10 = tpu.matmul %7, %9, %cst_7 {dimension_numbers = #tpu.dot_dimension_numbers<[1], [0], [0], [1], [0, 0, 1, 1], [], []>} : vector<8x128xf32>, vector<128x384xf32>, vector<8x384xf32> -> vector<8x384xf32>
    %c0_8 = arith.constant 0 : index
    %c0_9 = arith.constant 0 : index
    %11 = vector.load %arg6[%c0_8, %c0_9] : memref<1x384xf32, #tpu.memory_space<vmem>>, vector<1x384xf32>
    %12 = vector.broadcast %11 : vector<1x384xf32> to vector<8x384xf32>
    %13 = arith.addf %10, %12 : vector<8x384xf32>
    %c0_10 = arith.constant 0 : index
    %c0_11 = arith.constant 0 : index
    %14 = vector.load %arg5[%c0_10, %c0_11] : memref<128x384xf32, #tpu.memory_space<vmem>>, vector<128x384xf32>
    %cst_12 = arith.constant dense<0.000000e+00> : vector<8x384xf32>
    %15 = tpu.matmul %8, %14, %cst_12 {dimension_numbers = #tpu.dot_dimension_numbers<[1], [0], [0], [1], [0, 0, 1, 1], [], []>} : vector<8x128xf32>, vector<128x384xf32>, vector<8x384xf32> -> vector<8x384xf32>
    %c0_13 = arith.constant 0 : index
    %c0_14 = arith.constant 0 : index
    %16 = vector.load %arg7[%c0_13, %c0_14] : memref<1x384xf32, #tpu.memory_space<vmem>>, vector<1x384xf32>
    %17 = vector.broadcast %16 : vector<1x384xf32> to vector<8x384xf32>
    %18 = arith.addf %15, %17 : vector<8x384xf32>
    %19 = vector.extract_strided_slice %13 {offsets = [0, 0], sizes = [8, 128], strides = [1, 1]} : vector<8x384xf32> to vector<8x128xf32>
    %20 = vector.extract_strided_slice %18 {offsets = [0, 0], sizes = [8, 128], strides = [1, 1]} : vector<8x384xf32> to vector<8x128xf32>
    %21 = arith.addf %19, %20 : vector<8x128xf32>
    %22 = arith.negf %21 : vector<8x128xf32>
    %23 = math.exp %22 : vector<8x128xf32>
    %cst_15 = arith.constant 1.000000e+00 : f32
    %24 = vector.broadcast %cst_15 : f32 to vector<8x128xf32>
    %25 = arith.addf %24, %23 : vector<8x128xf32>
    %26 = arith.divf %24, %25 : vector<8x128xf32>
    %27 = vector.extract_strided_slice %13 {offsets = [0, 128], sizes = [8, 128], strides = [1, 1]} : vector<8x384xf32> to vector<8x128xf32>
    %28 = vector.extract_strided_slice %18 {offsets = [0, 128], sizes = [8, 128], strides = [1, 1]} : vector<8x384xf32> to vector<8x128xf32>
    %29 = arith.addf %27, %28 : vector<8x128xf32>
    %30 = arith.negf %29 : vector<8x128xf32>
    %31 = math.exp %30 : vector<8x128xf32>
    %cst_16 = arith.constant 1.000000e+00 : f32
    %32 = vector.broadcast %cst_16 : f32 to vector<8x128xf32>
    %33 = arith.addf %32, %31 : vector<8x128xf32>
    %34 = arith.divf %32, %33 : vector<8x128xf32>
    %35 = vector.extract_strided_slice %13 {offsets = [0, 256], sizes = [8, 128], strides = [1, 1]} : vector<8x384xf32> to vector<8x128xf32>
    %36 = vector.extract_strided_slice %18 {offsets = [0, 256], sizes = [8, 128], strides = [1, 1]} : vector<8x384xf32> to vector<8x128xf32>
    %37 = arith.mulf %26, %36 : vector<8x128xf32>
    %38 = arith.addf %35, %37 : vector<8x128xf32>
    %39 = math.tanh %38 : vector<8x128xf32>
    %cst_17 = arith.constant 1.000000e+00 : f32
    %40 = vector.broadcast %cst_17 : f32 to vector<8x128xf32>
    %41 = arith.subf %40, %34 : vector<8x128xf32>
    %42 = arith.mulf %41, %39 : vector<8x128xf32>
    %43 = arith.mulf %34, %8 : vector<8x128xf32>
    %44 = arith.addf %42, %43 : vector<8x128xf32>
    %c0_18 = arith.constant 0 : index
    %c0_19 = arith.constant 0 : index
    %45 = vector.load %arg14[%c0_18, %c0_19] : memref<8x128xf32, #tpu.memory_space<vmem>>, vector<8x128xf32>
    tpu.vector_store %arg14[%c0_18, %c0_19], %44 {strides = array<i32>} : memref<8x128xf32, #tpu.memory_space<vmem>>, vector<8x128xf32>,
    %c0_20 = arith.constant 0 : index
    %c0_21 = arith.constant 0 : index
    %c0_22 = arith.constant 0 : index
    %46 = vector.load %arg2[%c0_20, %c0_21, %c0_22] : memref<8x8x128xf32, #tpu.memory_space<vmem>>, vector<8x8x128xf32>
    %47 = vector.shape_cast %44 : vector<8x128xf32> to vector<8x1x128xf32>
    "tpu.trace_start"() <{level = 10 : i32, message = "bqh,bsh->bqs"}> : () -> ()
    %cst_23 = arith.constant dense<0.000000e+00> : vector<8x1x8xf32>
    %48 = tpu.matmul %47, %46, %cst_23 {dimension_numbers = #tpu.dot_dimension_numbers<[2], [2], [1], [1], [0, 0, 0, 1, 1, 1], [0], [0]>} : vector<8x1x128xf32>, vector<8x8x128xf32>, vector<8x1x8xf32> -> vector<8x1x8xf32>
    "tpu.trace_stop"() : () -> ()
    %cst_24 = arith.constant dense<0xFF800000> : vector<8x1xf32>
    %49 = vector.multi_reduction <maximumf>, %48, %cst_24 [2] : vector<8x1x8xf32> to vector<8x1xf32>
    %50 = vector.shape_cast %49 : vector<8x1xf32> to vector<8x1x1xf32>
    %51 = vector.broadcast %50 : vector<8x1x1xf32> to vector<8x1x8xf32>
    %52 = arith.subf %48, %51 : vector<8x1x8xf32>
    %53 = math.exp %52 : vector<8x1x8xf32>
    %cst_25 = arith.constant dense<0.000000e+00> : vector<8x1xf32>
    %54 = vector.multi_reduction <add>, %53, %cst_25 [2] : vector<8x1x8xf32> to vector<8x1xf32>
    %55 = vector.shape_cast %54 : vector<8x1xf32> to vector<8x1x1xf32>
    %56 = tpu.reciprocal %55 {approx = true} : vector<8x1x1xf32> -> vector<8x1x1xf32>
    %57 = vector.broadcast %56 : vector<8x1x1xf32> to vector<8x1x8xf32>
    %58 = arith.mulf %53, %57 : vector<8x1x8xf32>
    "tpu.trace_start"() <{level = 10 : i32, message = "bqs,bsh->bqh"}> : () -> ()
    %cst_26 = arith.constant dense<0.000000e+00> : vector<8x1x128xf32>
    %59 = tpu.matmul %58, %46, %cst_26 {dimension_numbers = #tpu.dot_dimension_numbers<[2], [1], [1], [2], [0, 0, 0, 1, 1, 2], [0], [0]>} : vector<8x1x8xf32>, vector<8x8x128xf32>, vector<8x1x128xf32> -> vector<8x1x128xf32>
    "tpu.trace_stop"() : () -> ()
    %60 = vector.shape_cast %59 : vector<8x1x128xf32> to vector<8x128xf32>
    %c0_27 = arith.constant 0 : index
    %c0_28 = arith.constant 0 : index
    %61 = vector.load %arg8[%c0_27, %c0_28] : memref<128x128xf32, #tpu.memory_space<vmem>>, vector<128x128xf32>
    %cst_29 = arith.constant dense<0.000000e+00> : vector<8x128xf32>
    %62 = tpu.matmul %44, %61, %cst_29 {dimension_numbers = #tpu.dot_dimension_numbers<[1], [0], [0], [1], [0, 0, 1, 1], [], []>} : vector<8x128xf32>, vector<128x128xf32>, vector<8x128xf32> -> vector<8x128xf32>
    %c0_30 = arith.constant 0 : index
    %c0_31 = arith.constant 0 : index
    %63 = vector.load %arg9[%c0_30, %c0_31] : memref<128x128xf32, #tpu.memory_space<vmem>>, vector<128x128xf32>
    %cst_32 = arith.constant dense<0.000000e+00> : vector<8x128xf32>
    %64 = tpu.matmul %60, %63, %cst_32 {dimension_numbers = #tpu.dot_dimension_numbers<[1], [0], [0], [1], [0, 0, 1, 1], [], []>} : vector<8x128xf32>, vector<128x128xf32>, vector<8x128xf32> -> vector<8x128xf32>
    %65 = arith.addf %62, %64 : vector<8x128xf32>
    %c0_33 = arith.constant 0 : index
    %c0_34 = arith.constant 0 : index
    %66 = vector.load %arg10[%c0_33, %c0_34] : memref<1x128xf32, #tpu.memory_space<vmem>>, vector<1x128xf32>
    %67 = vector.broadcast %66 : vector<1x128xf32> to vector<8x128xf32>
    %68 = arith.addf %65, %67 : vector<8x128xf32>
    %69 = math.tanh %68 : vector<8x128xf32>
    %c0_35 = arith.constant 0 : index
    %c0_36 = arith.constant 0 : index
    %70 = vector.load %arg11[%c0_35, %c0_36] : memref<128x128xf32, #tpu.memory_space<vmem>>, vector<128x128xf32>
    %cst_37 = arith.constant dense<0.000000e+00> : vector<8x128xf32>
    %71 = tpu.matmul %69, %70, %cst_37 {dimension_numbers = #tpu.dot_dimension_numbers<[1], [0], [0], [1], [0, 0, 1, 1], [], []>} : vector<8x128xf32>, vector<128x128xf32>, vector<8x128xf32> -> vector<8x128xf32>
    %c0_38 = arith.constant 0 : index
    %c0_39 = arith.constant 0 : index
    %72 = vector.load %arg12[%c0_38, %c0_39] : memref<1x128xf32, #tpu.memory_space<vmem>>, vector<1x128xf32>
    %73 = vector.broadcast %72 : vector<1x128xf32> to vector<8x128xf32>
    %74 = arith.addf %71, %73 : vector<8x128xf32>
    %cst_40 = arith.constant dense<0xFF800000> : vector<8xf32>
    %75 = vector.multi_reduction <maximumf>, %74, %cst_40 [1] : vector<8x128xf32> to vector<8xf32>
    %76 = vector.shape_cast %75 : vector<8xf32> to vector<8x1xf32>
    %77 = vector.broadcast %76 : vector<8x1xf32> to vector<8x128xf32>
    %78 = arith.subf %74, %77 : vector<8x128xf32>
    %79 = math.exp %78 : vector<8x128xf32>
    %cst_41 = arith.constant dense<0.000000e+00> : vector<8xf32>
    %80 = vector.multi_reduction <add>, %79, %cst_41 [1] : vector<8x128xf32> to vector<8xf32>
    %81 = vector.shape_cast %80 : vector<8xf32> to vector<8x1xf32>
    %82 = math.log %81 : vector<8x1xf32>
    %83 = vector.broadcast %82 : vector<8x1xf32> to vector<8x128xf32>
    %84 = arith.subf %78, %83 : vector<8x128xf32>
    %c0_42 = arith.constant 0 : index
    %c0_43 = arith.constant 0 : index
    %85 = vector.load %arg13[%c0_42, %c0_43] : memref<8x128xf32, #tpu.memory_space<vmem>>, vector<8x128xf32>
    tpu.vector_store %arg13[%c0_42, %c0_43], %84 {strides = array<i32>} : memref<8x128xf32, #tpu.memory_space<vmem>>, vector<8x128xf32>,
    return
  }
}

</mosaic_0001>

<llo_original>
// kernel: _lambda_.1
$region0: #{_lambda_.1}
  #allocation0 [shape = 'u32[]', space=smem, size = 0x4, offset = 0x4, fixed_abs, tag = 'smem constant byte address 0x4 - core index']
  #allocation1 [shape = 'u32[144,128]{1,0:T(1,128)}', space=vmem, size = 0x12000, scoped, tag = 'internal scratch']
  %s0 = inlined_call_operand.vmem [shape: s32[8,1], index: 0, kind: input, shape index: {}]
  %s1 = inlined_call_operand.vmem [shape: f32[8,128], index: 1, kind: input, shape index: {}]
  %s2 = inlined_call_operand.vmem [shape: f32[8,8,128], index: 2, kind: input, shape index: {}]
  %s3 = inlined_call_operand.hbm [shape: f32[64,128], index: 3, kind: input, shape index: {}]
  %s4 = inlined_call_operand.hbm [shape: f32[128,384], index: 4, kind: input, shape index: {}]
  %s5 = inlined_call_operand.hbm [shape: f32[128,384], index: 5, kind: input, shape index: {}]
  %s6 = inlined_call_operand.hbm [shape: f32[1,384], index: 6, kind: input, shape index: {}]
  %s7 = inlined_call_operand.hbm [shape: f32[1,384], index: 7, kind: input, shape index: {}]
  %s8 = inlined_call_operand.hbm [shape: f32[128,128], index: 8, kind: input, shape index: {}]
  %s9 = inlined_call_operand.hbm [shape: f32[128,128], index: 9, kind: input, shape index: {}]
  %s10 = inlined_call_operand.hbm [shape: f32[1,128], index: 10, kind: input, shape index: {}]
  %s11 = inlined_call_operand.vmem [shape: f32[128,128], index: 11, kind: input, shape index: {}]
  %s12 = inlined_call_operand.vmem [shape: f32[1,128], index: 12, kind: input, shape index: {}]
  %s13 = inlined_call_operand.vmem [shape: f32[8,128], index: 13, kind: output, shape index: {0}]
  %s14 = inlined_call_operand.vmem [shape: f32[8,128], index: 14, kind: output, shape index: {1}]
  %15 = xla_tuple %s13, %s14
  %s16 = sld [smem:[#allocation0]]
  $region102: #{_lambda_.1} parent=0
    _
  %s18 = ssub.s32 1, %s16
  %s19 = scalar_select 0, %s18, %s16
  $region1: #{_lambda_.1} parent=0
    #allocation2 [shape = 'u8[32768]{0}', space=vmem, size = 0x8000, scoped, tag = 'input window, operand 3, single buffered']
    #allocation3 [shape = 's32[1]{0}', space=sflag, size = 0x4, scoped, tag = 'scoped memory for _lambda_.1']
    #allocation4 [shape = 'u8[196608]{0}', space=vmem, size = 0x30000, scoped, tag = 'input window, operand 4, single buffered']
    #allocation5 [shape = 's32[1]{0}', space=sflag, size = 0x4, scoped, tag = 'scoped memory for _lambda_.1']
    #allocation6 [shape = 'u8[196608]{0}', space=vmem, size = 0x30000, scoped, tag = 'input window, operand 5, single buffered']
    #allocation7 [shape = 'u8[1536]{0}', space=vmem, size = 0x800, scoped, tag = 'input window, operand 6, single buffered']
    #allocation8 [shape = 's32[1]{0}', space=sflag, size = 0x4, scoped, tag = 'scoped memory for _lambda_.1']
    #allocation9 [shape = 'u8[1536]{0}', space=vmem, size = 0x800, scoped, tag = 'input window, operand 7, single buffered']
    #allocation10 [shape = 'u8[65536]{0}', space=vmem, size = 0x10000, scoped, tag = 'input window, operand 8, single buffered']
    #allocation11 [shape = 's32[1]{0}', space=sflag, size = 0x4, scoped, tag = 'scoped memory for _lambda_.1']
    #allocation12 [shape = 'u8[65536]{0}', space=vmem, size = 0x10000, scoped, tag = 'input window, operand 9, single buffered']
    #allocation13 [shape = 'u8[512]{0}', space=vmem, size = 0x400, scoped, tag = 'input window, operand 10, single buffered']
    #allocation14 [shape = 's32[1]{0}', space=sflag, size = 0x4, scoped, tag = 'scoped memory for _lambda_.1']
    %20 = vsyncpa [#allocation3], 0
    %21 = vsyncpa [#allocation5], 0
    %22 = vsyncpa [#allocation8], 0
    %23 = vsyncpa [#allocation11], 0
    %24 = vsyncpa [#allocation14], 0
    // Predicated region
    $region2: #{_lambda_.1} parent=1 // pred_check
      _
    $region3: #{_lambda_.1} parent=1 // pred_check_branch
      %26 = sbr.rel (0) target = $region5
    $region4: #{_lambda_.1} parent=1 // pred_region
      _
    $region5: #{_lambda_.1} parent=1 // pred_fallthru
      _
    // Predicated region
    $region6: #{_lambda_.1} parent=1 // pred_check
      _
    $region7: #{_lambda_.1} parent=1 // pred_check_branch
      %28 = sbr.rel (0) target = $region9
    $region8: #{_lambda_.1} parent=1 // pred_region
      _
    $region9: #{_lambda_.1} parent=1 // pred_fallthru
      _
    // Predicated region
    $region10: #{_lambda_.1} parent=1 // pred_check
      _
    $region11: #{_lambda_.1} parent=1 // pred_check_branch
      %30 = sbr.rel (0) target = $region13
    $region12: #{_lambda_.1} parent=1 // pred_region
      _
    $region13: #{_lambda_.1} parent=1 // pred_fallthru
      _
    // Predicated region
    $region14: #{_lambda_.1} parent=1 // pred_check
      _
    $region15: #{_lambda_.1} parent=1 // pred_check_branch
      %32 = sbr.rel (0) target = $region17
    $region16: #{_lambda_.1} parent=1 // pred_region
      %s34 = ssub.s32 1024, 1024
      %35 = vsyncadd [#allocation3], %s34
      %s36 = sshll.u32 [#allocation2], 4
      %s37 = int_to_ptr.vmem [resolvable:$true] %s36
      %42 = dma.hbm_to_vmem [thread:$0]  %s3, 1024, %s37, [#allocation3], 128, 128, 8
    $region17: #{_lambda_.1} parent=1 // pred_fallthru
      _
    // Predicated region
    $region18: #{_lambda_.1} parent=1 // pred_check
      _
    $region19: #{_lambda_.1} parent=1 // pred_check_branch
      %44 = sbr.rel (0) target = $region21
    $region20: #{_lambda_.1} parent=1 // pred_region
      %s46 = ssub.s32 6144, 6144
      %47 = vsyncadd [#allocation5], %s46
      %s48 = sshll.u32 [#allocation4], 4
      %s49 = int_to_ptr.vmem [resolvable:$true] %s48
      %54 = dma.hbm_to_vmem [thread:$0]  %s4, 6144, %s49, [#allocation5], 384, 384, 24
    $region21: #{_lambda_.1} parent=1 // pred_fallthru
      _
    // Predicated region
    $region22: #{_lambda_.1} parent=1 // pred_check
      _
    $region23: #{_lambda_.1} parent=1 // pred_check_branch
      %56 = sbr.rel (0) target = $region25
    $region24: #{_lambda_.1} parent=1 // pred_region
      %s58 = ssub.s32 6144, 6144
      %59 = vsyncadd [#allocation5], %s58
      %s60 = sshll.u32 [#allocation6], 4
      %s61 = int_to_ptr.vmem [resolvable:$true] %s60
      %66 = dma.hbm_to_vmem [thread:$0]  %s5, 6144, %s61, [#allocation5], 384, 384, 24
    $region25: #{_lambda_.1} parent=1 // pred_fallthru
      _
    // Predicated region
    $region26: #{_lambda_.1} parent=1 // pred_check
      _
    $region27: #{_lambda_.1} parent=1 // pred_check_branch
      %68 = sbr.rel (0) target = $region29
    $region28: #{_lambda_.1} parent=1 // pred_region
      %s70 = ssub.s32 48, 48
      %71 = vsyncadd [#allocation8], %s70
      %s73 = sshll.u32 [#allocation7], 4
      %s74 = int_to_ptr.vmem [resolvable:$true] %s73
      %76 = dma.hbm_to_vmem [thread:$0]  %s6, 48, %s74, [#allocation8]
    $region29: #{_lambda_.1} parent=1 // pred_fallthru
      _
    // Predicated region
    $region30: #{_lambda_.1} parent=1 // pred_check
      _
    $region31: #{_lambda_.1} parent=1 // pred_check_branch
      %78 = sbr.rel (0) target = $region33
    $region32: #{_lambda_.1} parent=1 // pred_region
      %s80 = ssub.s32 48, 48
      %81 = vsyncadd [#allocation8], %s80
      %s83 = sshll.u32 [#allocation9], 4
      %s84 = int_to_ptr.vmem [resolvable:$true] %s83
      %86 = dma.hbm_to_vmem [thread:$0]  %s7, 48, %s84, [#allocation8]
    $region33: #{_lambda_.1} parent=1 // pred_fallthru
      _
    // Predicated region
    $region34: #{_lambda_.1} parent=1 // pred_check
      _
    $region35: #{_lambda_.1} parent=1 // pred_check_branch
      %88 = sbr.rel (0) target = $region37
    $region36: #{_lambda_.1} parent=1 // pred_region
      %s90 = ssub.s32 2048, 2048
      %91 = vsyncadd [#allocation11], %s90
      %s92 = sshll.u32 [#allocation10], 4
      %s93 = int_to_ptr.vmem [resolvable:$true] %s92
      %98 = dma.hbm_to_vmem [thread:$0]  %s8, 2048, %s93, [#allocation11], 128, 128, 8
    $region37: #{_lambda_.1} parent=1 // pred_fallthru
      _
    // Predicated region
    $region38: #{_lambda_.1} parent=1 // pred_check
      _
    $region39: #{_lambda_.1} parent=1 // pred_check_branch
      %100 = sbr.rel (0) target = $region41
    $region40: #{_lambda_.1} parent=1 // pred_region
      %s102 = ssub.s32 2048, 2048
      %103 = vsyncadd [#allocation11], %s102
      %s104 = sshll.u32 [#allocation12], 4
      %s105 = int_to_ptr.vmem [resolvable:$true] %s104
      %110 = dma.hbm_to_vmem [thread:$0]  %s9, 2048, %s105, [#allocation11], 128, 128, 8
    $region41: #{_lambda_.1} parent=1 // pred_fallthru
      _
    // Predicated region
    $region42: #{_lambda_.1} parent=1 // pred_check
      _
    $region43: #{_lambda_.1} parent=1 // pred_check_branch
      %112 = sbr.rel (0) target = $region45
    $region44: #{_lambda_.1} parent=1 // pred_region
      %s114 = ssub.s32 16, 16
      %115 = vsyncadd [#allocation14], %s114
      %s117 = sshll.u32 [#allocation13], 4
      %s118 = int_to_ptr.vmem [resolvable:$true] %s117
      %120 = dma.hbm_to_vmem [thread:$0]  %s10, 16, %s118, [#allocation14]
    $region45: #{_lambda_.1} parent=1 // pred_fallthru
      _
    // Predicated region
    $region46: #{_lambda_.1} parent=1 // pred_check
      _
    $region47: #{_lambda_.1} parent=1 // pred_check_branch
      %122 = sbr.rel (0) target = $region49
    $region48: #{_lambda_.1} parent=1 // pred_region
      _
    $region49: #{_lambda_.1} parent=1 // pred_fallthru
      _
    // Predicated region
    $region50: #{_lambda_.1} parent=1 // pred_check
      _
    $region51: #{_lambda_.1} parent=1 // pred_check_branch
      %124 = sbr.rel (0) target = $region53
    $region52: #{_lambda_.1} parent=1 // pred_region
      _
    $region53: #{_lambda_.1} parent=1 // pred_fallthru
      _
    // Predicated region
    $region54: #{_lambda_.1} parent=1 // pred_check
      _
    $region55: #{_lambda_.1} parent=1 // pred_check_branch
      %126 = sbr.rel (0) target = $region57
    $region56: #{_lambda_.1} parent=1 // pred_region
      %127 = dma.done [#allocation3], 1024
    $region57: #{_lambda_.1} parent=1 // pred_fallthru
      _
    // Predicated region
    $region58: #{_lambda_.1} parent=1 // pred_check
      _
    $region59: #{_lambda_.1} parent=1 // pred_check_branch
      %129 = sbr.rel (0) target = $region61
    $region60: #{_lambda_.1} parent=1 // pred_region
      %130 = dma.done [#allocation5], 6144
    $region61: #{_lambda_.1} parent=1 // pred_fallthru
      _
    // Predicated region
    $region62: #{_lambda_.1} parent=1 // pred_check
      _
    $region63: #{_lambda_.1} parent=1 // pred_check_branch
      %132 = sbr.rel (0) target = $region65
    $region64: #{_lambda_.1} parent=1 // pred_region
      %133 = dma.done [#allocation5], 6144
    $region65: #{_lambda_.1} parent=1 // pred_fallthru
      _
    // Predicated region
    $region66: #{_lambda_.1} parent=1 // pred_check
      _
    $region67: #{_lambda_.1} parent=1 // pred_check_branch
      %135 = sbr.rel (0) target = $region69
    $region68: #{_lambda_.1} parent=1 // pred_region
      %136 = dma.done [#allocation8], 48
    $region69: #{_lambda_.1} parent=1 // pred_fallthru
      _
    // Predicated region
    $region70: #{_lambda_.1} parent=1 // pred_check
      _
    $region71: #{_lambda_.1} parent=1 // pred_check_branch
      %138 = sbr.rel (0) target = $region73
    $region72: #{_lambda_.1} parent=1 // pred_region
      %139 = dma.done [#allocation8], 48
    $region73: #{_lambda_.1} parent=1 // pred_fallthru
      _
    // Predicated region
    $region74: #{_lambda_.1} parent=1 // pred_check
      _
    $region75: #{_lambda_.1} parent=1 // pred_check_branch
      %141 = sbr.rel (0) target = $region77
    $region76: #{_lambda_.1} parent=1 // pred_region
      %142 = dma.done [#allocation11], 2048
    $region77: #{_lambda_.1} parent=1 // pred_fallthru
      _
    // Predicated region
    $region78: #{_lambda_.1} parent=1 // pred_check
      _
    $region79: #{_lambda_.1} parent=1 // pred_check_branch
      %144 = sbr.rel (0) target = $region81
    $region80: #{_lambda_.1} parent=1 // pred_region
      %145 = dma.done [#allocation11], 2048
    $region81: #{_lambda_.1} parent=1 // pred_fallthru
      _
    // Predicated region
    $region82: #{_lambda_.1} parent=1 // pred_check
      _
    $region83: #{_lambda_.1} parent=1 // pred_check_branch
      %147 = sbr.rel (0) target = $region85
    $region84: #{_lambda_.1} parent=1 // pred_region
      %148 = dma.done [#allocation14], 16
    $region85: #{_lambda_.1} parent=1 // pred_fallthru
      _
    %v149 = vld [vmem:[%s0] sm:$0xff]
    %v150 = vlaneseq
    %v151 = vand.u32 %v150, 127
    %152 = vset.pattern.permute.xlu0 0
    %153 = vperm.xlu0 %152, %v149
    %v154 = vpop.permute.xlu0 %153
    %vm155 = vcmp.eq.s32.totalorder %v151, %v154
    %v156 = vsel %vm155, 1, 0
    %v157 = vcvt.s32.f32 %v156
    %v158 = vld [vmem:[#allocation2] sm:$0xff]
    %v159 = vld [vmem:[#allocation2 + $0x8] sm:$0xff]
    %v160 = vld [vmem:[#allocation2 + $0x10] sm:$0xff]
    %v161 = vld [vmem:[#allocation2 + $0x18] sm:$0xff]
    %v162 = vld [vmem:[#allocation2 + $0x20] sm:$0xff]
    %v163 = vld [vmem:[#allocation2 + $0x28] sm:$0xff]
    %v164 = vld [vmem:[#allocation2 + $0x30] sm:$0xff]
    %v165 = vld [vmem:[#allocation2 + $0x38] sm:$0xff]
    %vm166 = vcmask 523264
    %v168 = vsel %vm166, %v157, 0
    %170 = vmatprep.subr.mxu0 0.0
    %171 = vmatpush1.msra.mxu0 0.0
    %172 = vmatprep.subr.mxu0 0.0
    %173 = vmatpush1.msra.mxu0 0.0
    %174 = vmatprep.subr.mxu0 0.0
    %175 = vmatpush1.msra.mxu0 0.0
    %176 = vmatprep.subr.mxu0 0.0
    %177 = vmatpush1.msra.mxu0 0.0
    %178 = vmatprep.subr.mxu0 0.0
    %179 = vmatpush1.msra.mxu0 0.0
    %180 = vmatprep.subr.mxu0 0.0
    %181 = vmatpush1.msra.mxu0 0.0
    %182 = vmatprep.subr.mxu0 0.0
    %183 = vmatpush1.msra.mxu0 0.0
    %184 = vmatprep.subr.mxu0 0.0
    %185 = vmatpush1.msra.mxu0 0.0
    %186 = vmatprep.subr.mxu0 0.0
    %187 = vmatpush1.msra.mxu0 %v165
    %188 = vmatprep.subr.mxu0 0.0
    %189 = vmatpush1.msra.mxu0 %v164
    %190 = vmatprep.subr.mxu0 0.0
    %191 = vmatpush1.msra.mxu0 %v163
    %192 = vmatprep.subr.mxu0 0.0
    %193 = vmatpush1.msra.mxu0 %v162
    %194 = vmatprep.subr.mxu0 0.0
    %195 = vmatpush1.msra.mxu0 %v161
    %196 = vmatprep.subr.mxu0 0.0
    %197 = vmatpush1.msra.mxu0 %v160
    %198 = vmatprep.subr.mxu0 0.0
    %199 = vmatpush1.msra.mxu0 %v159
    %200 = vmatprep.subr.mxu0 0.0
    %201 = vmatpush1.msra.mxu0 %v158
    %202 = vmatprep.subr.mxu0 0.0
    %203 = vmatpush2.msra.mxu0 0.0
    %204 = vmatprep.subr.mxu0 0.0
    %205 = vmatpush2.msra.mxu0 0.0
    %206 = vmatprep.subr.mxu0 0.0
    %207 = vmatpush2.msra.mxu0 0.0
    %208 = vmatprep.subr.mxu0 0.0
    %209 = vmatpush2.msra.mxu0 0.0
    %210 = vmatprep.subr.mxu0 0.0
    %211 = vmatpush2.msra.mxu0 0.0
    %212 = vmatprep.subr.mxu0 0.0
    %213 = vmatpush2.msra.mxu0 0.0
    %214 = vmatprep.subr.mxu0 0.0
    %215 = vmatpush2.msra.mxu0 0.0
    %216 = vmatprep.subr.mxu0 0.0
    %217 = vmatpush2.msra.mxu0 0.0
    %218 = vmatprep.subr.mxu0 0.0
    %219 = vmatpush2.msra.mxu0 0.0
    %220 = vmatprep.subr.mxu0 0.0
    %221 = vmatpush2.msra.mxu0 0.0
    %222 = vmatprep.subr.mxu0 0.0
    %223 = vmatpush2.msra.mxu0 0.0
    %224 = vmatprep.subr.mxu0 0.0
    %225 = vmatpush2.msra.mxu0 0.0
    %226 = vmatprep.subr.mxu0 0.0
    %227 = vmatpush2.msra.mxu0 0.0
    %228 = vmatprep.subr.mxu0 0.0
    %229 = vmatpush2.msra.mxu0 0.0
    %230 = vmatprep.subr.mxu0 0.0
    %231 = vmatpush2.msra.mxu0 0.0
    %232 = vmatprep.subr.mxu0 0.0
    %233 = vmatpush2.msra.mxu0 0.0
    %234 = vmatprep.mubr.f32.mxu0 0.0
    %235 = vmatmul.mubr.f32.gmra.mxu0 %v168
    %v236 = vpop.f32.mrf.mxu0
    %v237 = vadd.f32 0.0, %v236
    %v238 = vpop.f32.mrf.mxu0
    %239 = vdwg.mxu0
    %v240 = vld [vmem:[%s1] sm:$0xff]
    %v241 = vld [vmem:[#allocation4] sm:$0xff]
    %v242 = vld [vmem:[#allocation4 + $0x8] sm:$0xff]
    %v243 = vld [vmem:[#allocation4 + $0x10] sm:$0xff]
    %v244 = vld [vmem:[#allocation4 + $0x18] sm:$0xff]
    %v245 = vld [vmem:[#allocation4 + $0x20] sm:$0xff]
    %v246 = vld [vmem:[#allocation4 + $0x28] sm:$0xff]
    %v247 = vld [vmem:[#allocation4 + $0x30] sm:$0xff]
    %v248 = vld [vmem:[#allocation4 + $0x38] sm:$0xff]
    %v249 = vld [vmem:[#allocation4 + $0x40] sm:$0xff]
    %v250 = vld [vmem:[#allocation4 + $0x48] sm:$0xff]
    %v251 = vld [vmem:[#allocation4 + $0x50] sm:$0xff]
    %v252 = vld [vmem:[#allocation4 + $0x58] sm:$0xff]
    %v253 = vld [vmem:[#allocation4 + $0x60] sm:$0xff]
    %v254 = vld [vmem:[#allocation4 + $0x68] sm:$0xff]
    %v255 = vld [vmem:[#allocation4 + $0x70] sm:$0xff]
    %v256 = vld [vmem:[#allocation4 + $0x78] sm:$0xff]
    %v257 = vld [vmem:[#allocation4 + $0x80] sm:$0xff]
    %v258 = vld [vmem:[#allocation4 + $0x88] sm:$0xff]
    %v259 = vld [vmem:[#allocation4 + $0x90] sm:$0xff]
    %v260 = vld [vmem:[#allocation4 + $0x98] sm:$0xff]
    %v261 = vld [vmem:[#allocation4 + $0xa0] sm:$0xff]
    %v262 = vld [vmem:[#allocation4 + $0xa8] sm:$0xff]
    %v263 = vld [vmem:[#allocation4 + $0xb0] sm:$0xff]
    %v264 = vld [vmem:[#allocation4 + $0xb8] sm:$0xff]
    %v265 = vld [vmem:[#allocation4 + $0xc0] sm:$0xff]
    %v266 = vld [vmem:[#allocation4 + $0xc8] sm:$0xff]
    %v267 = vld [vmem:[#allocation4 + $0xd0] sm:$0xff]
    %v268 = vld [vmem:[#allocation4 + $0xd8] sm:$0xff]
    %v269 = vld [vmem:[#allocation4 + $0xe0] sm:$0xff]
    %v270 = vld [vmem:[#allocation4 + $0xe8] sm:$0xff]
    %v271 = vld [vmem:[#allocation4 + $0xf0] sm:$0xff]
    %v272 = vld [vmem:[#allocation4 + $0xf8] sm:$0xff]
    %v273 = vld [vmem:[#allocation4 + $0x100] sm:$0xff]
    %v274 = vld [vmem:[#allocation4 + $0x108] sm:$0xff]
    %v275 = vld [vmem:[#allocation4 + $0x110] sm:$0xff]
    %v276 = vld [vmem:[#allocation4 + $0x118] sm:$0xff]
    %v277 = vld [vmem:[#allocation4 + $0x120] sm:$0xff]
    %v278 = vld [vmem:[#allocation4 + $0x128] sm:$0xff]
    %v279 = vld [vmem:[#allocation4 + $0x130] sm:$0xff]
    %v280 = vld [vmem:[#allocation4 + $0x138] sm:$0xff]
    %v281 = vld [vmem:[#allocation4 + $0x140] sm:$0xff]
    %v282 = vld [vmem:[#allocation4 + $0x148] sm:$0xff]
    %v283 = vld [vmem:[#allocation4 + $0x150] sm:$0xff]
    %v284 = vld [vmem:[#allocation4 + $0x158] sm:$0xff]
    %v285 = vld [vmem:[#allocation4 + $0x160] sm:$0xff]
    %v286 = vld [vmem:[#allocation4 + $0x168] sm:$0xff]
    %v287 = vld [vmem:[#allocation4 + $0x170] sm:$0xff]
    %v288 = vld [vmem:[#allocation4 + $0x178] sm:$0xff]
    %v289 = vld [vmem:[#allocation7] sm:$0x7]
    %v291 = vlaneseq
    %v292 = vshrl.u32 %v291, 7
    %v293 = vsub.s32 0, %v292
    %v294 = vrot.slane %v289, %v293
    %v295 = vlaneseq
    %v296 = vshrl.u32 %v295, 7
    %v297 = vsub.s32 1, %v296
    %v298 = vrot.slane %v289, %v297
    %v299 = vlaneseq
    %v300 = vshrl.u32 %v299, 7
    %v301 = vsub.s32 2, %v300
    %v302 = vrot.slane %v289, %v301
    %306 = vmatprep.subr.mxu0 %v287
    %307 = vmatpush1.msra.mxu0 %v286
    %308 = vmatprep.subr.mxu0 %v284
    %309 = vmatpush1.msra.mxu0 %v283
    %310 = vmatprep.subr.mxu0 %v281
    %311 = vmatpush1.msra.mxu0 %v280
    %312 = vmatprep.subr.mxu0 %v278
    %313 = vmatpush1.msra.mxu0 %v277
    %314 = vmatprep.subr.mxu0 %v275
    %315 = vmatpush1.msra.mxu0 %v274
    %316 = vmatprep.subr.mxu0 %v272
    %317 = vmatpush1.msra.mxu0 %v271
    %318 = vmatprep.subr.mxu0 %v269
    %319 = vmatpush1.msra.mxu0 %v268
    %320 = vmatprep.subr.mxu0 %v266
    %321 = vmatpush1.msra.mxu0 %v265
    %322 = vmatprep.subr.mxu0 %v263
    %323 = vmatpush1.msra.mxu0 %v262
    %324 = vmatprep.subr.mxu0 %v260
    %325 = vmatpush1.msra.mxu0 %v259
    %326 = vmatprep.subr.mxu0 %v257
    %327 = vmatpush1.msra.mxu0 %v256
    %328 = vmatprep.subr.mxu0 %v254
    %329 = vmatpush1.msra.mxu0 %v253
    %330 = vmatprep.subr.mxu0 %v251
    %331 = vmatpush1.msra.mxu0 %v250
    %332 = vmatprep.subr.mxu0 %v248
    %333 = vmatpush1.msra.mxu0 %v247
    %334 = vmatprep.subr.mxu0 %v245
    %335 = vmatpush1.msra.mxu0 %v244
    %336 = vmatprep.subr.mxu0 %v242
    %337 = vmatpush1.msra.mxu0 %v241
    %338 = vmatprep.subr.mxu0 0.0
    %339 = vmatpush2.msra.mxu0 0.0
    %340 = vmatprep.subr.mxu0 0.0
    %341 = vmatpush2.msra.mxu0 0.0
    %342 = vmatprep.subr.mxu0 0.0
    %343 = vmatpush2.msra.mxu0 0.0
    %344 = vmatprep.subr.mxu0 0.0
    %345 = vmatpush2.msra.mxu0 0.0
    %346 = vmatprep.subr.mxu0 0.0
    %347 = vmatpush2.msra.mxu0 0.0
    %348 = vmatprep.subr.mxu0 0.0
    %349 = vmatpush2.msra.mxu0 0.0
    %350 = vmatprep.subr.mxu0 0.0
    %351 = vmatpush2.msra.mxu0 0.0
    %352 = vmatprep.subr.mxu0 0.0
    %353 = vmatpush2.msra.mxu0 0.0
    %354 = vmatprep.subr.mxu0 0.0
    %355 = vmatpush2.msra.mxu0 0.0
    %356 = vmatprep.subr.mxu0 0.0
    %357 = vmatpush2.msra.mxu0 0.0
    %358 = vmatprep.subr.mxu0 0.0
    %359 = vmatpush2.msra.mxu0 0.0
    %360 = vmatprep.subr.mxu0 0.0
    %361 = vmatpush2.msra.mxu0 0.0
    %362 = vmatprep.subr.mxu0 0.0
    %363 = vmatpush2.msra.mxu0 0.0
    %364 = vmatprep.subr.mxu0 0.0
    %365 = vmatpush2.msra.mxu0 0.0
    %366 = vmatprep.subr.mxu0 0.0
    %367 = vmatpush2.msra.mxu0 0.0
    %368 = vmatprep.subr.mxu0 0.0
    %369 = vmatpush2.msra.mxu0 0.0
    %370 = vmatprep.mubr.f32.mxu0 0.0
    %371 = vmatmul.mubr.f32.gmra.mxu0 %v237
    %v372 = vpop.f32.mrf.mxu0
    %v373 = vadd.f32 %v294, %v372
    %v374 = vpop.f32.mrf.mxu0
    %v375 = vadd.f32 %v298, %v374
    %376 = vdwg.mxu0
    %377 = vmatprep.subr.mxu0 0.0
    %378 = vmatpush1.msra.mxu0 %v288
    %379 = vmatprep.subr.mxu0 0.0
    %380 = vmatpush1.msra.mxu0 %v285
    %381 = vmatprep.subr.mxu0 0.0
    %382 = vmatpush1.msra.mxu0 %v282
    %383 = vmatprep.subr.mxu0 0.0
    %384 = vmatpush1.msra.mxu0 %v279
    %385 = vmatprep.subr.mxu0 0.0
    %386 = vmatpush1.msra.mxu0 %v276
    %387 = vmatprep.subr.mxu0 0.0
    %388 = vmatpush1.msra.mxu0 %v273
    %389 = vmatprep.subr.mxu0 0.0
    %390 = vmatpush1.msra.mxu0 %v270
    %391 = vmatprep.subr.mxu0 0.0
    %392 = vmatpush1.msra.mxu0 %v267
    %393 = vmatprep.subr.mxu0 0.0
    %394 = vmatpush1.msra.mxu0 %v264
    %395 = vmatprep.subr.mxu0 0.0
    %396 = vmatpush1.msra.mxu0 %v261
    %397 = vmatprep.subr.mxu0 0.0
    %398 = vmatpush1.msra.mxu0 %v258
    %399 = vmatprep.subr.mxu0 0.0
    %400 = vmatpush1.msra.mxu0 %v255
    %401 = vmatprep.subr.mxu0 0.0
    %402 = vmatpush1.msra.mxu0 %v252
    %403 = vmatprep.subr.mxu0 0.0
    %404 = vmatpush1.msra.mxu0 %v249
    %405 = vmatprep.subr.mxu0 0.0
    %406 = vmatpush1.msra.mxu0 %v246
    %407 = vmatprep.subr.mxu0 0.0
    %408 = vmatpush1.msra.mxu0 %v243
    %409 = vmatprep.subr.mxu0 0.0
    %410 = vmatpush2.msra.mxu0 0.0
    %411 = vmatprep.subr.mxu0 0.0
    %412 = vmatpush2.msra.mxu0 0.0
    %413 = vmatprep.subr.mxu0 0.0
    %414 = vmatpush2.msra.mxu0 0.0
    %415 = vmatprep.subr.mxu0 0.0
    %416 = vmatpush2.msra.mxu0 0.0
    %417 = vmatprep.subr.mxu0 0.0
    %418 = vmatpush2.msra.mxu0 0.0
    %419 = vmatprep.subr.mxu0 0.0
    %420 = vmatpush2.msra.mxu0 0.0
    %421 = vmatprep.subr.mxu0 0.0
    %422 = vmatpush2.msra.mxu0 0.0
    %423 = vmatprep.subr.mxu0 0.0
    %424 = vmatpush2.msra.mxu0 0.0
    %425 = vmatprep.subr.mxu0 0.0
    %426 = vmatpush2.msra.mxu0 0.0
    %427 = vmatprep.subr.mxu0 0.0
    %428 = vmatpush2.msra.mxu0 0.0
    %429 = vmatprep.subr.mxu0 0.0
    %430 = vmatpush2.msra.mxu0 0.0
    %431 = vmatprep.subr.mxu0 0.0
    %432 = vmatpush2.msra.mxu0 0.0
    %433 = vmatprep.subr.mxu0 0.0
    %434 = vmatpush2.msra.mxu0 0.0
    %435 = vmatprep.subr.mxu0 0.0
    %436 = vmatpush2.msra.mxu0 0.0
    %437 = vmatprep.subr.mxu0 0.0
    %438 = vmatpush2.msra.mxu0 0.0
    %439 = vmatprep.subr.mxu0 0.0
    %440 = vmatpush2.msra.mxu0 0.0
    %441 = vmatprep.mubr.f32.mxu0 0.0
    %442 = vmatmul.mubr.f32.gmra.mxu0 %v237
    %v443 = vpop.f32.mrf.mxu0
    %v444 = vadd.f32 %v302, %v443
    %v445 = vpop.f32.mrf.mxu0
    %446 = vdwg.mxu0
    %v447 = vld [vmem:[#allocation6] sm:$0xff]
    %v448 = vld [vmem:[#allocation6 + $0x8] sm:$0xff]
    %v449 = vld [vmem:[#allocation6 + $0x10] sm:$0xff]
    %v450 = vld [vmem:[#allocation6 + $0x18] sm:$0xff]
    %v451 = vld [vmem:[#allocation6 + $0x20] sm:$0xff]
    %v452 = vld [vmem:[#allocation6 + $0x28] sm:$0xff]
    %v453 = vld [vmem:[#allocation6 + $0x30] sm:$0xff]
    %v454 = vld [vmem:[#allocation6 + $0x38] sm:$0xff]
    %v455 = vld [vmem:[#allocation6 + $0x40] sm:$0xff]
    %v456 = vld [vmem:[#allocation6 + $0x48] sm:$0xff]
    %v457 = vld [vmem:[#allocation6 + $0x50] sm:$0xff]
    %v458 = vld [vmem:[#allocation6 + $0x58] sm:$0xff]
    %v459 = vld [vmem:[#allocation6 + $0x60] sm:$0xff]
    %v460 = vld [vmem:[#allocation6 + $0x68] sm:$0xff]
    %v461 = vld [vmem:[#allocation6 + $0x70] sm:$0xff]
    %v462 = vld [vmem:[#allocation6 + $0x78] sm:$0xff]
    %v463 = vld [vmem:[#allocation6 + $0x80] sm:$0xff]
    %v464 = vld [vmem:[#allocation6 + $0x88] sm:$0xff]
    %v465 = vld [vmem:[#allocation6 + $0x90] sm:$0xff]
    %v466 = vld [vmem:[#allocation6 + $0x98] sm:$0xff]
    %v467 = vld [vmem:[#allocation6 + $0xa0] sm:$0xff]
    %v468 = vld [vmem:[#allocation6 + $0xa8] sm:$0xff]
    %v469 = vld [vmem:[#allocation6 + $0xb0] sm:$0xff]
    %v470 = vld [vmem:[#allocation6 + $0xb8] sm:$0xff]
    %v471 = vld [vmem:[#allocation6 + $0xc0] sm:$0xff]
    %v472 = vld [vmem:[#allocation6 + $0xc8] sm:$0xff]
    %v473 = vld [vmem:[#allocation6 + $0xd0] sm:$0xff]
    %v474 = vld [vmem:[#allocation6 + $0xd8] sm:$0xff]
    %v475 = vld [vmem:[#allocation6 + $0xe0] sm:$0xff]
    %v476 = vld [vmem:[#allocation6 + $0xe8] sm:$0xff]
    %v477 = vld [vmem:[#allocation6 + $0xf0] sm:$0xff]
    %v478 = vld [vmem:[#allocation6 + $0xf8] sm:$0xff]
    %v479 = vld [vmem:[#allocation6 + $0x100] sm:$0xff]
    %v480 = vld [vmem:[#allocation6 + $0x108] sm:$0xff]
    %v481 = vld [vmem:[#allocation6 + $0x110] sm:$0xff]
    %v482 = vld [vmem:[#allocation6 + $0x118] sm:$0xff]
    %v483 = vld [vmem:[#allocation6 + $0x120] sm:$0xff]
    %v484 = vld [vmem:[#allocation6 + $0x128] sm:$0xff]
    %v485 = vld [vmem:[#allocation6 + $0x130] sm:$0xff]
    %v486 = vld [vmem:[#allocation6 + $0x138] sm:$0xff]
    %v487 = vld [vmem:[#allocation6 + $0x140] sm:$0xff]
    %v488 = vld [vmem:[#allocation6 + $0x148] sm:$0xff]
    %v489 = vld [vmem:[#allocation6 + $0x150] sm:$0xff]
    %v490 = vld [vmem:[#allocation6 + $0x158] sm:$0xff]
    %v491 = vld [vmem:[#allocation6 + $0x160] sm:$0xff]
    %v492 = vld [vmem:[#allocation6 + $0x168] sm:$0xff]
    %v493 = vld [vmem:[#allocation6 + $0x170] sm:$0xff]
    %v494 = vld [vmem:[#allocation6 + $0x178] sm:$0xff]
    %v495 = vld [vmem:[#allocation9] sm:$0x7]
    %v497 = vlaneseq
    %v498 = vshrl.u32 %v497, 7
    %v499 = vsub.s32 0, %v498
    %v500 = vrot.slane %v495, %v499
    %v501 = vlaneseq
    %v502 = vshrl.u32 %v501, 7
    %v503 = vsub.s32 1, %v502
    %v504 = vrot.slane %v495, %v503
    %v505 = vlaneseq
    %v506 = vshrl.u32 %v505, 7
    %v507 = vsub.s32 2, %v506
    %v508 = vrot.slane %v495, %v507
    %512 = vmatprep.subr.mxu0 %v493
    %513 = vmatpush1.msra.mxu0 %v492
    %514 = vmatprep.subr.mxu0 %v490
    %515 = vmatpush1.msra.mxu0 %v489
    %516 = vmatprep.subr.mxu0 %v487
    %517 = vmatpush1.msra.mxu0 %v486
    %518 = vmatprep.subr.mxu0 %v484
    %519 = vmatpush1.msra.mxu0 %v483
    %520 = vmatprep.subr.mxu0 %v481
    %521 = vmatpush1.msra.mxu0 %v480
    %522 = vmatprep.subr.mxu0 %v478
    %523 = vmatpush1.msra.mxu0 %v477
    %524 = vmatprep.subr.mxu0 %v475
    %525 = vmatpush1.msra.mxu0 %v474
    %526 = vmatprep.subr.mxu0 %v472
    %527 = vmatpush1.msra.mxu0 %v471
    %528 = vmatprep.subr.mxu0 %v469
    %529 = vmatpush1.msra.mxu0 %v468
    %530 = vmatprep.subr.mxu0 %v466
    %531 = vmatpush1.msra.mxu0 %v465
    %532 = vmatprep.subr.mxu0 %v463
    %533 = vmatpush1.msra.mxu0 %v462
    %534 = vmatprep.subr.mxu0 %v460
    %535 = vmatpush1.msra.mxu0 %v459
    %536 = vmatprep.subr.mxu0 %v457
    %537 = vmatpush1.msra.mxu0 %v456
    %538 = vmatprep.subr.mxu0 %v454
    %539 = vmatpush1.msra.mxu0 %v453
    %540 = vmatprep.subr.mxu0 %v451
    %541 = vmatpush1.msra.mxu0 %v450
    %542 = vmatprep.subr.mxu0 %v448
    %543 = vmatpush1.msra.mxu0 %v447
    %544 = vmatprep.subr.mxu0 0.0
    %545 = vmatpush2.msra.mxu0 0.0
    %546 = vmatprep.subr.mxu0 0.0
    %547 = vmatpush2.msra.mxu0 0.0
    %548 = vmatprep.subr.mxu0 0.0
    %549 = vmatpush2.msra.mxu0 0.0
    %550 = vmatprep.subr.mxu0 0.0
    %551 = vmatpush2.msra.mxu0 0.0
    %552 = vmatprep.subr.mxu0 0.0
    %553 = vmatpush2.msra.mxu0 0.0
    %554 = vmatprep.subr.mxu0 0.0
    %555 = vmatpush2.msra.mxu0 0.0
    %556 = vmatprep.subr.mxu0 0.0
    %557 = vmatpush2.msra.mxu0 0.0
    %558 = vmatprep.subr.mxu0 0.0
    %559 = vmatpush2.msra.mxu0 0.0
    %560 = vmatprep.subr.mxu0 0.0
    %561 = vmatpush2.msra.mxu0 0.0
    %562 = vmatprep.subr.mxu0 0.0
    %563 = vmatpush2.msra.mxu0 0.0
    %564 = vmatprep.subr.mxu0 0.0
    %565 = vmatpush2.msra.mxu0 0.0
    %566 = vmatprep.subr.mxu0 0.0
    %567 = vmatpush2.msra.mxu0 0.0
    %568 = vmatprep.subr.mxu0 0.0
    %569 = vmatpush2.msra.mxu0 0.0
    %570 = vmatprep.subr.mxu0 0.0
    %571 = vmatpush2.msra.mxu0 0.0
    %572 = vmatprep.subr.mxu0 0.0
    %573 = vmatpush2.msra.mxu0 0.0
    %574 = vmatprep.subr.mxu0 0.0
    %575 = vmatpush2.msra.mxu0 0.0
    %576 = vmatprep.mubr.f32.mxu0 0.0
    %577 = vmatmul.mubr.f32.gmra.mxu0 %v240
    %v578 = vpop.f32.mrf.mxu0
    %v579 = vadd.f32 %v500, %v578
    %v580 = vpop.f32.mrf.mxu0
    %v581 = vadd.f32 %v504, %v580
    %582 = vdwg.mxu0
    %583 = vmatprep.subr.mxu0 0.0
    %584 = vmatpush1.msra.mxu0 %v494
    %585 = vmatprep.subr.mxu0 0.0
    %586 = vmatpush1.msra.mxu0 %v491
    %587 = vmatprep.subr.mxu0 0.0
    %588 = vmatpush1.msra.mxu0 %v488
    %589 = vmatprep.subr.mxu0 0.0
    %590 = vmatpush1.msra.mxu0 %v485
    %591 = vmatprep.subr.mxu0 0.0
    %592 = vmatpush1.msra.mxu0 %v482
    %593 = vmatprep.subr.mxu0 0.0
    %594 = vmatpush1.msra.mxu0 %v479
    %595 = vmatprep.subr.mxu0 0.0
    %596 = vmatpush1.msra.mxu0 %v476
    %597 = vmatprep.subr.mxu0 0.0
    %598 = vmatpush1.msra.mxu0 %v473
    %599 = vmatprep.subr.mxu0 0.0
    %600 = vmatpush1.msra.mxu0 %v470
    %601 = vmatprep.subr.mxu0 0.0
    %602 = vmatpush1.msra.mxu0 %v467
    %603 = vmatprep.subr.mxu0 0.0
    %604 = vmatpush1.msra.mxu0 %v464
    %605 = vmatprep.subr.mxu0 0.0
    %606 = vmatpush1.msra.mxu0 %v461
    %607 = vmatprep.subr.mxu0 0.0
    %608 = vmatpush1.msra.mxu0 %v458
    %609 = vmatprep.subr.mxu0 0.0
    %610 = vmatpush1.msra.mxu0 %v455
    %611 = vmatprep.subr.mxu0 0.0
    %612 = vmatpush1.msra.mxu0 %v452
    %613 = vmatprep.subr.mxu0 0.0
    %614 = vmatpush1.msra.mxu0 %v449
    %615 = vmatprep.subr.mxu0 0.0
    %616 = vmatpush2.msra.mxu0 0.0
    %617 = vmatprep.subr.mxu0 0.0
    %618 = vmatpush2.msra.mxu0 0.0
    %619 = vmatprep.subr.mxu0 0.0
    %620 = vmatpush2.msra.mxu0 0.0
    %621 = vmatprep.subr.mxu0 0.0
    %622 = vmatpush2.msra.mxu0 0.0
    %623 = vmatprep.subr.mxu0 0.0
    %624 = vmatpush2.msra.mxu0 0.0
    %625 = vmatprep.subr.mxu0 0.0
    %626 = vmatpush2.msra.mxu0 0.0
    %627 = vmatprep.subr.mxu0 0.0
    %628 = vmatpush2.msra.mxu0 0.0
    %629 = vmatprep.subr.mxu0 0.0
    %630 = vmatpush2.msra.mxu0 0.0
    %631 = vmatprep.subr.mxu0 0.0
    %632 = vmatpush2.msra.mxu0 0.0
    %633 = vmatprep.subr.mxu0 0.0
    %634 = vmatpush2.msra.mxu0 0.0
    %635 = vmatprep.subr.mxu0 0.0
    %636 = vmatpush2.msra.mxu0 0.0
    %637 = vmatprep.subr.mxu0 0.0
    %638 = vmatpush2.msra.mxu0 0.0
    %639 = vmatprep.subr.mxu0 0.0
    %640 = vmatpush2.msra.mxu0 0.0
    %641 = vmatprep.subr.mxu0 0.0
    %642 = vmatpush2.msra.mxu0 0.0
    %643 = vmatprep.subr.mxu0 0.0
    %644 = vmatpush2.msra.mxu0 0.0
    %645 = vmatprep.subr.mxu0 0.0
    %646 = vmatpush2.msra.mxu0 0.0
    %647 = vmatprep.mubr.f32.mxu0 0.0
    %648 = vmatmul.mubr.f32.gmra.mxu0 %v240
    %v649 = vpop.f32.mrf.mxu0
    %v650 = vadd.f32 %v508, %v649
    %v651 = vpop.f32.mrf.mxu0
    %652 = vdwg.mxu0
    %v653 = vadd.f32 %v373, %v579
    %v654 = vxor.u32 %v653, 2147483648
    %v655 = vmul.f32 %v654, 1.442695
    %v656 = vpow.pop %v655
    %v657 = vadd.f32 %v656, 1.0
    %v658 = vrcp.pop %v657
    %v659 = vmul.f32 1.0, %v658
    %v660 = vadd.f32 %v375, %v581
    %v661 = vxor.u32 %v660, 2147483648
    %v662 = vmul.f32 %v661, 1.442695
    %v663 = vpow.pop %v662
    %v664 = vadd.f32 %v663, 1.0
    %v665 = vrcp.pop %v664
    %v666 = vmul.f32 1.0, %v665
    %v667 = vmul.f32 %v659, %v650
    %v668 = vadd.f32 %v444, %v667
    %v669 = vtanh.pop %v668
    %v670 = vsub.f32 1.0, %v666
    %v671 = vmul.f32 %v670, %v669
    %v672 = vmul.f32 %v666, %v240
    %v673 = vadd.f32 %v671, %v672
    %674 = vst [vmem:[%s14] sm:$0xff] %v673
    %v675 = vld [vmem:[%s2] sm:$0xff]
    %v676 = vld [vmem:[%s2 + $0x8] sm:$0xff]
    %v677 = vld [vmem:[%s2 + $0x10] sm:$0xff]
    %v678 = vld [vmem:[%s2 + $0x18] sm:$0xff]
    %v679 = vld [vmem:[%s2 + $0x20] sm:$0xff]
    %v680 = vld [vmem:[%s2 + $0x28] sm:$0xff]
    %v681 = vld [vmem:[%s2 + $0x30] sm:$0xff]
    %v682 = vld [vmem:[%s2 + $0x38] sm:$0xff]
    %v684 = vcombine.high %v673, %v673
    %v686 = vunpack.c.l.s4 1966171168
    %v687 = vunpack.c.0.s8 %v686
    %v688 = vlaneseq
    %v689 = vshrl.u32 %v688, 7
    %v690 = vsub.s32 %v687, %v689
    %v691 = vrot.slane %v673, %v690
    %v693 = vunpack.c.l.s4 1966171168
    %v694 = vunpack.c.0.s8 %v693
    %v695 = vlaneseq
    %v696 = vshrl.u32 %v695, 7
    %v697 = vsub.s32 %v694, %v696
    %v698 = vrot.slane %v684, %v697
    %v699 = vcombine.high %v691, %v691
    %v700 = vcombine.high %v698, %v698
    %v702 = vunpack.c.l.s4 1966171168
    %v703 = vunpack.c.0.s8 %v702
    %v704 = vlaneseq
    %v705 = vshrl.u32 %v704, 7
    %v706 = vsub.s32 %v703, %v705
    %v707 = vrot.slane %v691, %v706
    %v709 = vunpack.c.l.s4 1966171168
    %v710 = vunpack.c.0.s8 %v709
    %v711 = vlaneseq
    %v712 = vshrl.u32 %v711, 7
    %v713 = vsub.s32 %v710, %v712
    %v714 = vrot.slane %v698, %v713
    %v716 = vunpack.c.l.s4 1966171168
    %v717 = vunpack.c.0.s8 %v716
    %v718 = vlaneseq
    %v719 = vshrl.u32 %v718, 7
    %v720 = vsub.s32 %v717, %v719
    %v721 = vrot.slane %v699, %v720
    %v723 = vunpack.c.l.s4 1966171168
    %v724 = vunpack.c.0.s8 %v723
    %v725 = vlaneseq
    %v726 = vshrl.u32 %v725, 7
    %v727 = vsub.s32 %v724, %v726
    %v728 = vrot.slane %v700, %v727
    %v729 = vcombine.high %v707, %v707
    %v730 = vcombine.high %v714, %v714
    %v731 = vcombine.high %v721, %v721
    %v732 = vcombine.high %v728, %v728
    %741 = vmatprep.subr.mxu0 0.0
    %742 = vmatpush1.xpose.msra.mxu0 0.0
    %743 = vmatprep.subr.mxu0 0.0
    %744 = vmatpush1.xpose.msra.mxu0 0.0
    %745 = vmatprep.subr.mxu0 0.0
    %746 = vmatpush1.xpose.msra.mxu0 0.0
    %747 = vmatprep.subr.mxu0 0.0
    %748 = vmatpush1.xpose.msra.mxu0 0.0
    %749 = vmatprep.subr.mxu0 0.0
    %750 = vmatpush1.xpose.msra.mxu0 0.0
    %751 = vmatprep.subr.mxu0 0.0
    %752 = vmatpush1.xpose.msra.mxu0 0.0
    %753 = vmatprep.subr.mxu0 0.0
    %754 = vmatpush1.xpose.msra.mxu0 0.0
    %755 = vmatprep.subr.mxu0 0.0
    %756 = vmatpush1.xpose.msra.mxu0 0.0
    %757 = vmatprep.subr.mxu0 0.0
    %758 = vmatpush1.xpose.msra.mxu0 0.0
    %759 = vmatprep.subr.mxu0 0.0
    %760 = vmatpush1.xpose.msra.mxu0 0.0
    %761 = vmatprep.subr.mxu0 0.0
    %762 = vmatpush1.xpose.msra.mxu0 0.0
    %763 = vmatprep.subr.mxu0 0.0
    %764 = vmatpush1.xpose.msra.mxu0 0.0
    %765 = vmatprep.subr.mxu0 0.0
    %766 = vmatpush1.xpose.msra.mxu0 0.0
    %767 = vmatprep.subr.mxu0 0.0
    %768 = vmatpush1.xpose.msra.mxu0 0.0
    %769 = vmatprep.subr.mxu0 0.0
    %770 = vmatpush1.xpose.msra.mxu0 0.0
    %771 = vmatprep.subr.mxu0 0.0
    %772 = vmatpush1.xpose.msra.mxu0 %v675
    %773 = vmatprep.subr.mxu0 0.0
    %774 = vmatpush2.xpose.msra.mxu0 0.0
    %775 = vmatprep.subr.mxu0 0.0
    %776 = vmatpush2.xpose.msra.mxu0 0.0
    %777 = vmatprep.subr.mxu0 0.0
    %778 = vmatpush2.xpose.msra.mxu0 0.0
    %779 = vmatprep.subr.mxu0 0.0
    %780 = vmatpush2.xpose.msra.mxu0 0.0
    %781 = vmatprep.subr.mxu0 0.0
    %782 = vmatpush2.xpose.msra.mxu0 0.0
    %783 = vmatprep.subr.mxu0 0.0
    %784 = vmatpush2.xpose.msra.mxu0 0.0
    %785 = vmatprep.subr.mxu0 0.0
    %786 = vmatpush2.xpose.msra.mxu0 0.0
    %787 = vmatprep.subr.mxu0 0.0
    %788 = vmatpush2.xpose.msra.mxu0 0.0
    %789 = vmatprep.subr.mxu0 0.0
    %790 = vmatpush2.xpose.msra.mxu0 0.0
    %791 = vmatprep.subr.mxu0 0.0
    %792 = vmatpush2.xpose.msra.mxu0 0.0
    %793 = vmatprep.subr.mxu0 0.0
    %794 = vmatpush2.xpose.msra.mxu0 0.0
    %795 = vmatprep.subr.mxu0 0.0
    %796 = vmatpush2.xpose.msra.mxu0 0.0
    %797 = vmatprep.subr.mxu0 0.0
    %798 = vmatpush2.xpose.msra.mxu0 0.0
    %799 = vmatprep.subr.mxu0 0.0
    %800 = vmatpush2.xpose.msra.mxu0 0.0
    %801 = vmatprep.subr.mxu0 0.0
    %802 = vmatpush2.xpose.msra.mxu0 0.0
    %803 = vmatprep.subr.mxu0 0.0
    %804 = vmatpush2.xpose.msra.mxu0 0.0
    %805 = vmatprep.mubr.f32.mxu0 0.0
    %806 = vmatmul.mubr.f32.gmra.mxu0 %v707
    %v807 = vpop.f32.mrf.mxu0
    %v808 = vadd.f32 0.0, %v807
    %v809 = vpop.f32.mrf.mxu0
    %810 = vdwg.mxu0
    %811 = vmatprep.subr.mxu0 0.0
    %812 = vmatpush1.xpose.msra.mxu0 0.0
    %813 = vmatprep.subr.mxu0 0.0
    %814 = vmatpush1.xpose.msra.mxu0 0.0
    %815 = vmatprep.subr.mxu0 0.0
    %816 = vmatpush1.xpose.msra.mxu0 0.0
    %817 = vmatprep.subr.mxu0 0.0
    %818 = vmatpush1.xpose.msra.mxu0 0.0
    %819 = vmatprep.subr.mxu0 0.0
    %820 = vmatpush1.xpose.msra.mxu0 0.0
    %821 = vmatprep.subr.mxu0 0.0
    %822 = vmatpush1.xpose.msra.mxu0 0.0
    %823 = vmatprep.subr.mxu0 0.0
    %824 = vmatpush1.xpose.msra.mxu0 0.0
    %825 = vmatprep.subr.mxu0 0.0
    %826 = vmatpush1.xpose.msra.mxu0 0.0
    %827 = vmatprep.subr.mxu0 0.0
    %828 = vmatpush1.xpose.msra.mxu0 0.0
    %829 = vmatprep.subr.mxu0 0.0
    %830 = vmatpush1.xpose.msra.mxu0 0.0
    %831 = vmatprep.subr.mxu0 0.0
    %832 = vmatpush1.xpose.msra.mxu0 0.0
    %833 = vmatprep.subr.mxu0 0.0
    %834 = vmatpush1.xpose.msra.mxu0 0.0
    %835 = vmatprep.subr.mxu0 0.0
    %836 = vmatpush1.xpose.msra.mxu0 0.0
    %837 = vmatprep.subr.mxu0 0.0
    %838 = vmatpush1.xpose.msra.mxu0 0.0
    %839 = vmatprep.subr.mxu0 0.0
    %840 = vmatpush1.xpose.msra.mxu0 0.0
    %841 = vmatprep.subr.mxu0 0.0
    %842 = vmatpush1.xpose.msra.mxu0 %v676
    %843 = vmatprep.subr.mxu0 0.0
    %844 = vmatpush2.xpose.msra.mxu0 0.0
    %845 = vmatprep.subr.mxu0 0.0
    %846 = vmatpush2.xpose.msra.mxu0 0.0
    %847 = vmatprep.subr.mxu0 0.0
    %848 = vmatpush2.xpose.msra.mxu0 0.0
    %849 = vmatprep.subr.mxu0 0.0
    %850 = vmatpush2.xpose.msra.mxu0 0.0
    %851 = vmatprep.subr.mxu0 0.0
    %852 = vmatpush2.xpose.msra.mxu0 0.0
    %853 = vmatprep.subr.mxu0 0.0
    %854 = vmatpush2.xpose.msra.mxu0 0.0
    %855 = vmatprep.subr.mxu0 0.0
    %856 = vmatpush2.xpose.msra.mxu0 0.0
    %857 = vmatprep.subr.mxu0 0.0
    %858 = vmatpush2.xpose.msra.mxu0 0.0
    %859 = vmatprep.subr.mxu0 0.0
    %860 = vmatpush2.xpose.msra.mxu0 0.0
    %861 = vmatprep.subr.mxu0 0.0
    %862 = vmatpush2.xpose.msra.mxu0 0.0
    %863 = vmatprep.subr.mxu0 0.0
    %864 = vmatpush2.xpose.msra.mxu0 0.0
    %865 = vmatprep.subr.mxu0 0.0
    %866 = vmatpush2.xpose.msra.mxu0 0.0
    %867 = vmatprep.subr.mxu0 0.0
    %868 = vmatpush2.xpose.msra.mxu0 0.0
    %869 = vmatprep.subr.mxu0 0.0
    %870 = vmatpush2.xpose.msra.mxu0 0.0
    %871 = vmatprep.subr.mxu0 0.0
    %872 = vmatpush2.xpose.msra.mxu0 0.0
    %873 = vmatprep.subr.mxu0 0.0
    %874 = vmatpush2.xpose.msra.mxu0 0.0
    %875 = vmatprep.mubr.f32.mxu0 0.0
    %876 = vmatmul.mubr.f32.gmra.mxu0 %v721
    %v877 = vpop.f32.mrf.mxu0
    %v878 = vadd.f32 0.0, %v877
    %v879 = vpop.f32.mrf.mxu0
    %880 = vdwg.mxu0
    %881 = vmatprep.subr.mxu0 0.0
    %882 = vmatpush1.xpose.msra.mxu0 0.0
    %883 = vmatprep.subr.mxu0 0.0
    %884 = vmatpush1.xpose.msra.mxu0 0.0
    %885 = vmatprep.subr.mxu0 0.0
    %886 = vmatpush1.xpose.msra.mxu0 0.0
    %887 = vmatprep.subr.mxu0 0.0
    %888 = vmatpush1.xpose.msra.mxu0 0.0
    %889 = vmatprep.subr.mxu0 0.0
    %890 = vmatpush1.xpose.msra.mxu0 0.0
    %891 = vmatprep.subr.mxu0 0.0
    %892 = vmatpush1.xpose.msra.mxu0 0.0
    %893 = vmatprep.subr.mxu0 0.0
    %894 = vmatpush1.xpose.msra.mxu0 0.0
    %895 = vmatprep.subr.mxu0 0.0
    %896 = vmatpush1.xpose.msra.mxu0 0.0
    %897 = vmatprep.subr.mxu0 0.0
    %898 = vmatpush1.xpose.msra.mxu0 0.0
    %899 = vmatprep.subr.mxu0 0.0
    %900 = vmatpush1.xpose.msra.mxu0 0.0
    %901 = vmatprep.subr.mxu0 0.0
    %902 = vmatpush1.xpose.msra.mxu0 0.0
    %903 = vmatprep.subr.mxu0 0.0
    %904 = vmatpush1.xpose.msra.mxu0 0.0
    %905 = vmatprep.subr.mxu0 0.0
    %906 = vmatpush1.xpose.msra.mxu0 0.0
    %907 = vmatprep.subr.mxu0 0.0
    %908 = vmatpush1.xpose.msra.mxu0 0.0
    %909 = vmatprep.subr.mxu0 0.0
    %910 = vmatpush1.xpose.msra.mxu0 0.0
    %911 = vmatprep.subr.mxu0 0.0
    %912 = vmatpush1.xpose.msra.mxu0 %v677
    %913 = vmatprep.subr.mxu0 0.0
    %914 = vmatpush2.xpose.msra.mxu0 0.0
    %915 = vmatprep.subr.mxu0 0.0
    %916 = vmatpush2.xpose.msra.mxu0 0.0
    %917 = vmatprep.subr.mxu0 0.0
    %918 = vmatpush2.xpose.msra.mxu0 0.0
    %919 = vmatprep.subr.mxu0 0.0
    %920 = vmatpush2.xpose.msra.mxu0 0.0
    %921 = vmatprep.subr.mxu0 0.0
    %922 = vmatpush2.xpose.msra.mxu0 0.0
    %923 = vmatprep.subr.mxu0 0.0
    %924 = vmatpush2.xpose.msra.mxu0 0.0
    %925 = vmatprep.subr.mxu0 0.0
    %926 = vmatpush2.xpose.msra.mxu0 0.0
    %927 = vmatprep.subr.mxu0 0.0
    %928 = vmatpush2.xpose.msra.mxu0 0.0
    %929 = vmatprep.subr.mxu0 0.0
    %930 = vmatpush2.xpose.msra.mxu0 0.0
    %931 = vmatprep.subr.mxu0 0.0
    %932 = vmatpush2.xpose.msra.mxu0 0.0
    %933 = vmatprep.subr.mxu0 0.0
    %934 = vmatpush2.xpose.msra.mxu0 0.0
    %935 = vmatprep.subr.mxu0 0.0
    %936 = vmatpush2.xpose.msra.mxu0 0.0
    %937 = vmatprep.subr.mxu0 0.0
    %938 = vmatpush2.xpose.msra.mxu0 0.0
    %939 = vmatprep.subr.mxu0 0.0
    %940 = vmatpush2.xpose.msra.mxu0 0.0
    %941 = vmatprep.subr.mxu0 0.0
    %942 = vmatpush2.xpose.msra.mxu0 0.0
    %943 = vmatprep.subr.mxu0 0.0
    %944 = vmatpush2.xpose.msra.mxu0 0.0
    %945 = vmatprep.mubr.f32.mxu0 0.0
    %946 = vmatmul.mubr.f32.gmra.mxu0 %v729
    %v947 = vpop.f32.mrf.mxu0
    %v948 = vadd.f32 0.0, %v947
    %v949 = vpop.f32.mrf.mxu0
    %950 = vdwg.mxu0
    %951 = vmatprep.subr.mxu0 0.0
    %952 = vmatpush1.xpose.msra.mxu0 0.0
    %953 = vmatprep.subr.mxu0 0.0
    %954 = vmatpush1.xpose.msra.mxu0 0.0
    %955 = vmatprep.subr.mxu0 0.0
    %956 = vmatpush1.xpose.msra.mxu0 0.0
    %957 = vmatprep.subr.mxu0 0.0
    %958 = vmatpush1.xpose.msra.mxu0 0.0
    %959 = vmatprep.subr.mxu0 0.0
    %960 = vmatpush1.xpose.msra.mxu0 0.0
    %961 = vmatprep.subr.mxu0 0.0
    %962 = vmatpush1.xpose.msra.mxu0 0.0
    %963 = vmatprep.subr.mxu0 0.0
    %964 = vmatpush1.xpose.msra.mxu0 0.0
    %965 = vmatprep.subr.mxu0 0.0
    %966 = vmatpush1.xpose.msra.mxu0 0.0
    %967 = vmatprep.subr.mxu0 0.0
    %968 = vmatpush1.xpose.msra.mxu0 0.0
    %969 = vmatprep.subr.mxu0 0.0
    %970 = vmatpush1.xpose.msra.mxu0 0.0
    %971 = vmatprep.subr.mxu0 0.0
    %972 = vmatpush1.xpose.msra.mxu0 0.0
    %973 = vmatprep.subr.mxu0 0.0
    %974 = vmatpush1.xpose.msra.mxu0 0.0
    %975 = vmatprep.subr.mxu0 0.0
    %976 = vmatpush1.xpose.msra.mxu0 0.0
    %977 = vmatprep.subr.mxu0 0.0
    %978 = vmatpush1.xpose.msra.mxu0 0.0
    %979 = vmatprep.subr.mxu0 0.0
    %980 = vmatpush1.xpose.msra.mxu0 0.0
    %981 = vmatprep.subr.mxu0 0.0
    %982 = vmatpush1.xpose.msra.mxu0 %v678
    %983 = vmatprep.subr.mxu0 0.0
    %984 = vmatpush2.xpose.msra.mxu0 0.0
    %985 = vmatprep.subr.mxu0 0.0
    %986 = vmatpush2.xpose.msra.mxu0 0.0
    %987 = vmatprep.subr.mxu0 0.0
    %988 = vmatpush2.xpose.msra.mxu0 0.0
    %989 = vmatprep.subr.mxu0 0.0
    %990 = vmatpush2.xpose.msra.mxu0 0.0
    %991 = vmatprep.subr.mxu0 0.0
    %992 = vmatpush2.xpose.msra.mxu0 0.0
    %993 = vmatprep.subr.mxu0 0.0
    %994 = vmatpush2.xpose.msra.mxu0 0.0
    %995 = vmatprep.subr.mxu0 0.0
    %996 = vmatpush2.xpose.msra.mxu0 0.0
    %997 = vmatprep.subr.mxu0 0.0
    %998 = vmatpush2.xpose.msra.mxu0 0.0
    %999 = vmatprep.subr.mxu0 0.0
    %1000 = vmatpush2.xpose.msra.mxu0 0.0
    %1001 = vmatprep.subr.mxu0 0.0
    %1002 = vmatpush2.xpose.msra.mxu0 0.0
    %1003 = vmatprep.subr.mxu0 0.0
    %1004 = vmatpush2.xpose.msra.mxu0 0.0
    %1005 = vmatprep.subr.mxu0 0.0
    %1006 = vmatpush2.xpose.msra.mxu0 0.0
    %1007 = vmatprep.subr.mxu0 0.0
    %1008 = vmatpush2.xpose.msra.mxu0 0.0
    %1009 = vmatprep.subr.mxu0 0.0
    %1010 = vmatpush2.xpose.msra.mxu0 0.0
    %1011 = vmatprep.subr.mxu0 0.0
    %1012 = vmatpush2.xpose.msra.mxu0 0.0
    %1013 = vmatprep.subr.mxu0 0.0
    %1014 = vmatpush2.xpose.msra.mxu0 0.0
    %1015 = vmatprep.mubr.f32.mxu0 0.0
    %1016 = vmatmul.mubr.f32.gmra.mxu0 %v731
    %v1017 = vpop.f32.mrf.mxu0
    %v1018 = vadd.f32 0.0, %v1017
    %v1019 = vpop.f32.mrf.mxu0
    %1020 = vdwg.mxu0
    %1021 = vmatprep.subr.mxu0 0.0
    %1022 = vmatpush1.xpose.msra.mxu0 0.0
    %1023 = vmatprep.subr.mxu0 0.0
    %1024 = vmatpush1.xpose.msra.mxu0 0.0
    %1025 = vmatprep.subr.mxu0 0.0
    %1026 = vmatpush1.xpose.msra.mxu0 0.0
    %1027 = vmatprep.subr.mxu0 0.0
    %1028 = vmatpush1.xpose.msra.mxu0 0.0
    %1029 = vmatprep.subr.mxu0 0.0
    %1030 = vmatpush1.xpose.msra.mxu0 0.0
    %1031 = vmatprep.subr.mxu0 0.0
    %1032 = vmatpush1.xpose.msra.mxu0 0.0
    %1033 = vmatprep.subr.mxu0 0.0
    %1034 = vmatpush1.xpose.msra.mxu0 0.0
    %1035 = vmatprep.subr.mxu0 0.0
    %1036 = vmatpush1.xpose.msra.mxu0 0.0
    %1037 = vmatprep.subr.mxu0 0.0
    %1038 = vmatpush1.xpose.msra.mxu0 0.0
    %1039 = vmatprep.subr.mxu0 0.0
    %1040 = vmatpush1.xpose.msra.mxu0 0.0
    %1041 = vmatprep.subr.mxu0 0.0
    %1042 = vmatpush1.xpose.msra.mxu0 0.0
    %1043 = vmatprep.subr.mxu0 0.0
    %1044 = vmatpush1.xpose.msra.mxu0 0.0
    %1045 = vmatprep.subr.mxu0 0.0
    %1046 = vmatpush1.xpose.msra.mxu0 0.0
    %1047 = vmatprep.subr.mxu0 0.0
    %1048 = vmatpush1.xpose.msra.mxu0 0.0
    %1049 = vmatprep.subr.mxu0 0.0
    %1050 = vmatpush1.xpose.msra.mxu0 0.0
    %1051 = vmatprep.subr.mxu0 0.0
    %1052 = vmatpush1.xpose.msra.mxu0 %v679
    %1053 = vmatprep.subr.mxu0 0.0
    %1054 = vmatpush2.xpose.msra.mxu0 0.0
    %1055 = vmatprep.subr.mxu0 0.0
    %1056 = vmatpush2.xpose.msra.mxu0 0.0
    %1057 = vmatprep.subr.mxu0 0.0
    %1058 = vmatpush2.xpose.msra.mxu0 0.0
    %1059 = vmatprep.subr.mxu0 0.0
    %1060 = vmatpush2.xpose.msra.mxu0 0.0
    %1061 = vmatprep.subr.mxu0 0.0
    %1062 = vmatpush2.xpose.msra.mxu0 0.0
    %1063 = vmatprep.subr.mxu0 0.0
    %1064 = vmatpush2.xpose.msra.mxu0 0.0
    %1065 = vmatprep.subr.mxu0 0.0
    %1066 = vmatpush2.xpose.msra.mxu0 0.0
    %1067 = vmatprep.subr.mxu0 0.0
    %1068 = vmatpush2.xpose.msra.mxu0 0.0
    %1069 = vmatprep.subr.mxu0 0.0
    %1070 = vmatpush2.xpose.msra.mxu0 0.0
    %1071 = vmatprep.subr.mxu0 0.0
    %1072 = vmatpush2.xpose.msra.mxu0 0.0
    %1073 = vmatprep.subr.mxu0 0.0
    %1074 = vmatpush2.xpose.msra.mxu0 0.0
    %1075 = vmatprep.subr.mxu0 0.0
    %1076 = vmatpush2.xpose.msra.mxu0 0.0
    %1077 = vmatprep.subr.mxu0 0.0
    %1078 = vmatpush2.xpose.msra.mxu0 0.0
    %1079 = vmatprep.subr.mxu0 0.0
    %1080 = vmatpush2.xpose.msra.mxu0 0.0
    %1081 = vmatprep.subr.mxu0 0.0
    %1082 = vmatpush2.xpose.msra.mxu0 0.0
    %1083 = vmatprep.subr.mxu0 0.0
    %1084 = vmatpush2.xpose.msra.mxu0 0.0
    %1085 = vmatprep.mubr.f32.mxu0 0.0
    %1086 = vmatmul.mubr.f32.gmra.mxu0 %v714
    %v1087 = vpop.f32.mrf.mxu0
    %v1088 = vadd.f32 0.0, %v1087
    %v1089 = vpop.f32.mrf.mxu0
    %1090 = vdwg.mxu0
    %1091 = vmatprep.subr.mxu0 0.0
    %1092 = vmatpush1.xpose.msra.mxu0 0.0
    %1093 = vmatprep.subr.mxu0 0.0
    %1094 = vmatpush1.xpose.msra.mxu0 0.0
    %1095 = vmatprep.subr.mxu0 0.0
    %1096 = vmatpush1.xpose.msra.mxu0 0.0
    %1097 = vmatprep.subr.mxu0 0.0
    %1098 = vmatpush1.xpose.msra.mxu0 0.0
    %1099 = vmatprep.subr.mxu0 0.0
    %1100 = vmatpush1.xpose.msra.mxu0 0.0
    %1101 = vmatprep.subr.mxu0 0.0
    %1102 = vmatpush1.xpose.msra.mxu0 0.0
    %1103 = vmatprep.subr.mxu0 0.0
    %1104 = vmatpush1.xpose.msra.mxu0 0.0
    %1105 = vmatprep.subr.mxu0 0.0
    %1106 = vmatpush1.xpose.msra.mxu0 0.0
    %1107 = vmatprep.subr.mxu0 0.0
    %1108 = vmatpush1.xpose.msra.mxu0 0.0
    %1109 = vmatprep.subr.mxu0 0.0
    %1110 = vmatpush1.xpose.msra.mxu0 0.0
    %1111 = vmatprep.subr.mxu0 0.0
    %1112 = vmatpush1.xpose.msra.mxu0 0.0
    %1113 = vmatprep.subr.mxu0 0.0
    %1114 = vmatpush1.xpose.msra.mxu0 0.0
    %1115 = vmatprep.subr.mxu0 0.0
    %1116 = vmatpush1.xpose.msra.mxu0 0.0
    %1117 = vmatprep.subr.mxu0 0.0
    %1118 = vmatpush1.xpose.msra.mxu0 0.0
    %1119 = vmatprep.subr.mxu0 0.0
    %1120 = vmatpush1.xpose.msra.mxu0 0.0
    %1121 = vmatprep.subr.mxu0 0.0
    %1122 = vmatpush1.xpose.msra.mxu0 %v680
    %1123 = vmatprep.subr.mxu0 0.0
    %1124 = vmatpush2.xpose.msra.mxu0 0.0
    %1125 = vmatprep.subr.mxu0 0.0
    %1126 = vmatpush2.xpose.msra.mxu0 0.0
    %1127 = vmatprep.subr.mxu0 0.0
    %1128 = vmatpush2.xpose.msra.mxu0 0.0
    %1129 = vmatprep.subr.mxu0 0.0
    %1130 = vmatpush2.xpose.msra.mxu0 0.0
    %1131 = vmatprep.subr.mxu0 0.0
    %1132 = vmatpush2.xpose.msra.mxu0 0.0
    %1133 = vmatprep.subr.mxu0 0.0
    %1134 = vmatpush2.xpose.msra.mxu0 0.0
    %1135 = vmatprep.subr.mxu0 0.0
    %1136 = vmatpush2.xpose.msra.mxu0 0.0
    %1137 = vmatprep.subr.mxu0 0.0
    %1138 = vmatpush2.xpose.msra.mxu0 0.0
    %1139 = vmatprep.subr.mxu0 0.0
    %1140 = vmatpush2.xpose.msra.mxu0 0.0
    %1141 = vmatprep.subr.mxu0 0.0
    %1142 = vmatpush2.xpose.msra.mxu0 0.0
    %1143 = vmatprep.subr.mxu0 0.0
    %1144 = vmatpush2.xpose.msra.mxu0 0.0
    %1145 = vmatprep.subr.mxu0 0.0
    %1146 = vmatpush2.xpose.msra.mxu0 0.0
    %1147 = vmatprep.subr.mxu0 0.0
    %1148 = vmatpush2.xpose.msra.mxu0 0.0
    %1149 = vmatprep.subr.mxu0 0.0
    %1150 = vmatpush2.xpose.msra.mxu0 0.0
    %1151 = vmatprep.subr.mxu0 0.0
    %1152 = vmatpush2.xpose.msra.mxu0 0.0
    %1153 = vmatprep.subr.mxu0 0.0
    %1154 = vmatpush2.xpose.msra.mxu0 0.0
    %1155 = vmatprep.mubr.f32.mxu0 0.0
    %1156 = vmatmul.mubr.f32.gmra.mxu0 %v728
    %v1157 = vpop.f32.mrf.mxu0
    %v1158 = vadd.f32 0.0, %v1157
    %v1159 = vpop.f32.mrf.mxu0
    %1160 = vdwg.mxu0
    %1161 = vmatprep.subr.mxu0 0.0
    %1162 = vmatpush1.xpose.msra.mxu0 0.0
    %1163 = vmatprep.subr.mxu0 0.0
    %1164 = vmatpush1.xpose.msra.mxu0 0.0
    %1165 = vmatprep.subr.mxu0 0.0
    %1166 = vmatpush1.xpose.msra.mxu0 0.0
    %1167 = vmatprep.subr.mxu0 0.0
    %1168 = vmatpush1.xpose.msra.mxu0 0.0
    %1169 = vmatprep.subr.mxu0 0.0
    %1170 = vmatpush1.xpose.msra.mxu0 0.0
    %1171 = vmatprep.subr.mxu0 0.0
    %1172 = vmatpush1.xpose.msra.mxu0 0.0
    %1173 = vmatprep.subr.mxu0 0.0
    %1174 = vmatpush1.xpose.msra.mxu0 0.0
    %1175 = vmatprep.subr.mxu0 0.0
    %1176 = vmatpush1.xpose.msra.mxu0 0.0
    %1177 = vmatprep.subr.mxu0 0.0
    %1178 = vmatpush1.xpose.msra.mxu0 0.0
    %1179 = vmatprep.subr.mxu0 0.0
    %1180 = vmatpush1.xpose.msra.mxu0 0.0
    %1181 = vmatprep.subr.mxu0 0.0
    %1182 = vmatpush1.xpose.msra.mxu0 0.0
    %1183 = vmatprep.subr.mxu0 0.0
    %1184 = vmatpush1.xpose.msra.mxu0 0.0
    %1185 = vmatprep.subr.mxu0 0.0
    %1186 = vmatpush1.xpose.msra.mxu0 0.0
    %1187 = vmatprep.subr.mxu0 0.0
    %1188 = vmatpush1.xpose.msra.mxu0 0.0
    %1189 = vmatprep.subr.mxu0 0.0
    %1190 = vmatpush1.xpose.msra.mxu0 0.0
    %1191 = vmatprep.subr.mxu0 0.0
    %1192 = vmatpush1.xpose.msra.mxu0 %v681
    %1193 = vmatprep.subr.mxu0 0.0
    %1194 = vmatpush2.xpose.msra.mxu0 0.0
    %1195 = vmatprep.subr.mxu0 0.0
    %1196 = vmatpush2.xpose.msra.mxu0 0.0
    %1197 = vmatprep.subr.mxu0 0.0
    %1198 = vmatpush2.xpose.msra.mxu0 0.0
    %1199 = vmatprep.subr.mxu0 0.0
    %1200 = vmatpush2.xpose.msra.mxu0 0.0
    %1201 = vmatprep.subr.mxu0 0.0
    %1202 = vmatpush2.xpose.msra.mxu0 0.0
    %1203 = vmatprep.subr.mxu0 0.0
    %1204 = vmatpush2.xpose.msra.mxu0 0.0
    %1205 = vmatprep.subr.mxu0 0.0
    %1206 = vmatpush2.xpose.msra.mxu0 0.0
    %1207 = vmatprep.subr.mxu0 0.0
    %1208 = vmatpush2.xpose.msra.mxu0 0.0
    %1209 = vmatprep.subr.mxu0 0.0
    %1210 = vmatpush2.xpose.msra.mxu0 0.0
    %1211 = vmatprep.subr.mxu0 0.0
    %1212 = vmatpush2.xpose.msra.mxu0 0.0
    %1213 = vmatprep.subr.mxu0 0.0
    %1214 = vmatpush2.xpose.msra.mxu0 0.0
    %1215 = vmatprep.subr.mxu0 0.0
    %1216 = vmatpush2.xpose.msra.mxu0 0.0
    %1217 = vmatprep.subr.mxu0 0.0
    %1218 = vmatpush2.xpose.msra.mxu0 0.0
    %1219 = vmatprep.subr.mxu0 0.0
    %1220 = vmatpush2.xpose.msra.mxu0 0.0
    %1221 = vmatprep.subr.mxu0 0.0
    %1222 = vmatpush2.xpose.msra.mxu0 0.0
    %1223 = vmatprep.subr.mxu0 0.0
    %1224 = vmatpush2.xpose.msra.mxu0 0.0
    %1225 = vmatprep.mubr.f32.mxu0 0.0
    %1226 = vmatmul.mubr.f32.gmra.mxu0 %v730
    %v1227 = vpop.f32.mrf.mxu0
    %v1228 = vadd.f32 0.0, %v1227
    %v1229 = vpop.f32.mrf.mxu0
    %1230 = vdwg.mxu0
    %1231 = vmatprep.subr.mxu0 0.0
    %1232 = vmatpush1.xpose.msra.mxu0 0.0
    %1233 = vmatprep.subr.mxu0 0.0
    %1234 = vmatpush1.xpose.msra.mxu0 0.0
    %1235 = vmatprep.subr.mxu0 0.0
    %1236 = vmatpush1.xpose.msra.mxu0 0.0
    %1237 = vmatprep.subr.mxu0 0.0
    %1238 = vmatpush1.xpose.msra.mxu0 0.0
    %1239 = vmatprep.subr.mxu0 0.0
    %1240 = vmatpush1.xpose.msra.mxu0 0.0
    %1241 = vmatprep.subr.mxu0 0.0
    %1242 = vmatpush1.xpose.msra.mxu0 0.0
    %1243 = vmatprep.subr.mxu0 0.0
    %1244 = vmatpush1.xpose.msra.mxu0 0.0
    %1245 = vmatprep.subr.mxu0 0.0
    %1246 = vmatpush1.xpose.msra.mxu0 0.0
    %1247 = vmatprep.subr.mxu0 0.0
    %1248 = vmatpush1.xpose.msra.mxu0 0.0
    %1249 = vmatprep.subr.mxu0 0.0
    %1250 = vmatpush1.xpose.msra.mxu0 0.0
    %1251 = vmatprep.subr.mxu0 0.0
    %1252 = vmatpush1.xpose.msra.mxu0 0.0
    %1253 = vmatprep.subr.mxu0 0.0
    %1254 = vmatpush1.xpose.msra.mxu0 0.0
    %1255 = vmatprep.subr.mxu0 0.0
    %1256 = vmatpush1.xpose.msra.mxu0 0.0
    %1257 = vmatprep.subr.mxu0 0.0
    %1258 = vmatpush1.xpose.msra.mxu0 0.0
    %1259 = vmatprep.subr.mxu0 0.0
    %1260 = vmatpush1.xpose.msra.mxu0 0.0
    %1261 = vmatprep.subr.mxu0 0.0
    %1262 = vmatpush1.xpose.msra.mxu0 %v682
    %1263 = vmatprep.subr.mxu0 0.0
    %1264 = vmatpush2.xpose.msra.mxu0 0.0
    %1265 = vmatprep.subr.mxu0 0.0
    %1266 = vmatpush2.xpose.msra.mxu0 0.0
    %1267 = vmatprep.subr.mxu0 0.0
    %1268 = vmatpush2.xpose.msra.mxu0 0.0
    %1269 = vmatprep.subr.mxu0 0.0
    %1270 = vmatpush2.xpose.msra.mxu0 0.0
    %1271 = vmatprep.subr.mxu0 0.0
    %1272 = vmatpush2.xpose.msra.mxu0 0.0
    %1273 = vmatprep.subr.mxu0 0.0
    %1274 = vmatpush2.xpose.msra.mxu0 0.0
    %1275 = vmatprep.subr.mxu0 0.0
    %1276 = vmatpush2.xpose.msra.mxu0 0.0
    %1277 = vmatprep.subr.mxu0 0.0
    %1278 = vmatpush2.xpose.msra.mxu0 0.0
    %1279 = vmatprep.subr.mxu0 0.0
    %1280 = vmatpush2.xpose.msra.mxu0 0.0
    %1281 = vmatprep.subr.mxu0 0.0
    %1282 = vmatpush2.xpose.msra.mxu0 0.0
    %1283 = vmatprep.subr.mxu0 0.0
    %1284 = vmatpush2.xpose.msra.mxu0 0.0
    %1285 = vmatprep.subr.mxu0 0.0
    %1286 = vmatpush2.xpose.msra.mxu0 0.0
    %1287 = vmatprep.subr.mxu0 0.0
    %1288 = vmatpush2.xpose.msra.mxu0 0.0
    %1289 = vmatprep.subr.mxu0 0.0
    %1290 = vmatpush2.xpose.msra.mxu0 0.0
    %1291 = vmatprep.subr.mxu0 0.0
    %1292 = vmatpush2.xpose.msra.mxu0 0.0
    %1293 = vmatprep.subr.mxu0 0.0
    %1294 = vmatpush2.xpose.msra.mxu0 0.0
    %1295 = vmatprep.mubr.f32.mxu0 0.0
    %1296 = vmatmul.mubr.f32.gmra.mxu0 %v732
    %v1297 = vpop.f32.mrf.mxu0
    %v1298 = vadd.f32 0.0, %v1297
    %v1299 = vpop.f32.mrf.mxu0
    %1300 = vdwg.mxu0
    %vm1301 = vcmask 57344
    %v1302 = vsel %vm1301, %v808, -inf
    %1303 = vmax.xlane.f32.xlu0 %v1302
    %v1304 = vpop.xlane.xlu0 %1303
    %v1305 = vsel %vm1301, %v878, -inf
    %1306 = vmax.xlane.f32.xlu0 %v1305
    %v1307 = vpop.xlane.xlu0 %1306
    %v1308 = vsel %vm1301, %v948, -inf
    %1309 = vmax.xlane.f32.xlu0 %v1308
    %v1310 = vpop.xlane.xlu0 %1309
    %v1311 = vsel %vm1301, %v1018, -inf
    %1312 = vmax.xlane.f32.xlu0 %v1311
    %v1313 = vpop.xlane.xlu0 %1312
    %v1314 = vsel %vm1301, %v1088, -inf
    %1315 = vmax.xlane.f32.xlu0 %v1314
    %v1316 = vpop.xlane.xlu0 %1315
    %v1317 = vsel %vm1301, %v1158, -inf
    %1318 = vmax.xlane.f32.xlu0 %v1317
    %v1319 = vpop.xlane.xlu0 %1318
    %v1320 = vsel %vm1301, %v1228, -inf
    %1321 = vmax.xlane.f32.xlu0 %v1320
    %v1322 = vpop.xlane.xlu0 %1321
    %v1323 = vsel %vm1301, %v1298, -inf
    %1324 = vmax.xlane.f32.xlu0 %v1323
    %v1325 = vpop.xlane.xlu0 %1324
    %v1326 = vsub.f32 %v808, %v1304
    %v1327 = vsub.f32 %v878, %v1307
    %v1328 = vsub.f32 %v948, %v1310
    %v1329 = vsub.f32 %v1018, %v1313
    %v1330 = vsub.f32 %v1088, %v1316
    %v1331 = vsub.f32 %v1158, %v1319
    %v1332 = vsub.f32 %v1228, %v1322
    %v1333 = vsub.f32 %v1298, %v1325
    %v1334 = vmul.f32 %v1326, 1.442695
    %v1335 = vpow.pop %v1334
    %v1336 = vmul.f32 %v1327, 1.442695
    %v1337 = vpow.pop %v1336
    %v1338 = vmul.f32 %v1328, 1.442695
    %v1339 = vpow.pop %v1338
    %v1340 = vmul.f32 %v1329, 1.442695
    %v1341 = vpow.pop %v1340
    %v1342 = vmul.f32 %v1330, 1.442695
    %v1343 = vpow.pop %v1342
    %v1344 = vmul.f32 %v1331, 1.442695
    %v1345 = vpow.pop %v1344
    %v1346 = vmul.f32 %v1332, 1.442695
    %v1347 = vpow.pop %v1346
    %v1348 = vmul.f32 %v1333, 1.442695
    %v1349 = vpow.pop %v1348
    %v1350 = vsel %vm1301, %v1335, 0.0
    %1351 = vadd.xlane.f32.xlu0 %v1350
    %v1352 = vpop.xlane.xlu0 %1351
    %v1353 = vsel %vm1301, %v1337, 0.0
    %1354 = vadd.xlane.f32.xlu0 %v1353
    %v1355 = vpop.xlane.xlu0 %1354
    %v1356 = vsel %vm1301, %v1339, 0.0
    %1357 = vadd.xlane.f32.xlu0 %v1356
    %v1358 = vpop.xlane.xlu0 %1357
    %v1359 = vsel %vm1301, %v1341, 0.0
    %1360 = vadd.xlane.f32.xlu0 %v1359
    %v1361 = vpop.xlane.xlu0 %1360
    %v1362 = vsel %vm1301, %v1343, 0.0
    %1363 = vadd.xlane.f32.xlu0 %v1362
    %v1364 = vpop.xlane.xlu0 %1363
    %v1365 = vsel %vm1301, %v1345, 0.0
    %1366 = vadd.xlane.f32.xlu0 %v1365
    %v1367 = vpop.xlane.xlu0 %1366
    %v1368 = vsel %vm1301, %v1347, 0.0
    %1369 = vadd.xlane.f32.xlu0 %v1368
    %v1370 = vpop.xlane.xlu0 %1369
    %v1371 = vsel %vm1301, %v1349, 0.0
    %1372 = vadd.xlane.f32.xlu0 %v1371
    %v1373 = vpop.xlane.xlu0 %1372
    %v1374 = vrcp.pop %v1352
    %v1375 = vrcp.pop %v1355
    %v1376 = vrcp.pop %v1358
    %v1377 = vrcp.pop %v1361
    %v1378 = vrcp.pop %v1364
    %v1379 = vrcp.pop %v1367
    %v1380 = vrcp.pop %v1370
    %v1381 = vrcp.pop %v1373
    %v1382 = vmul.f32 %v1335, %v1374
    %v1383 = vmul.f32 %v1337, %v1375
    %v1384 = vmul.f32 %v1339, %v1376
    %v1385 = vmul.f32 %v1341, %v1377
    %v1386 = vmul.f32 %v1343, %v1378
    %v1387 = vmul.f32 %v1345, %v1379
    %v1388 = vmul.f32 %v1347, %v1380
    %v1389 = vmul.f32 %v1349, %v1381
    %vm1390 = vcmask 64512
    %v1392 = vsel %vm1390, %v1382, 0
    %1394 = vmatprep.subr.mxu0 0.0
    %1395 = vmatpush1.msra.mxu0 0.0
    %1396 = vmatprep.subr.mxu0 0.0
    %1397 = vmatpush1.msra.mxu0 0.0
    %1398 = vmatprep.subr.mxu0 0.0
    %1399 = vmatpush1.msra.mxu0 0.0
    %1400 = vmatprep.subr.mxu0 0.0
    %1401 = vmatpush1.msra.mxu0 0.0
    %1402 = vmatprep.subr.mxu0 0.0
    %1403 = vmatpush1.msra.mxu0 0.0
    %1404 = vmatprep.subr.mxu0 0.0
    %1405 = vmatpush1.msra.mxu0 0.0
    %1406 = vmatprep.subr.mxu0 0.0
    %1407 = vmatpush1.msra.mxu0 0.0
    %1408 = vmatprep.subr.mxu0 0.0
    %1409 = vmatpush1.msra.mxu0 0.0
    %1410 = vmatprep.subr.mxu0 0.0
    %1411 = vmatpush1.msra.mxu0 0.0
    %1412 = vmatprep.subr.mxu0 0.0
    %1413 = vmatpush1.msra.mxu0 0.0
    %1414 = vmatprep.subr.mxu0 0.0
    %1415 = vmatpush1.msra.mxu0 0.0
    %1416 = vmatprep.subr.mxu0 0.0
    %1417 = vmatpush1.msra.mxu0 0.0
    %1418 = vmatprep.subr.mxu0 0.0
    %1419 = vmatpush1.msra.mxu0 0.0
    %1420 = vmatprep.subr.mxu0 0.0
    %1421 = vmatpush1.msra.mxu0 0.0
    %1422 = vmatprep.subr.mxu0 0.0
    %1423 = vmatpush1.msra.mxu0 0.0
    %1424 = vmatprep.subr.mxu0 0.0
    %1425 = vmatpush1.msra.mxu0 %v675
    %1426 = vmatprep.subr.mxu0 0.0
    %1427 = vmatpush2.msra.mxu0 0.0
    %1428 = vmatprep.subr.mxu0 0.0
    %1429 = vmatpush2.msra.mxu0 0.0
    %1430 = vmatprep.subr.mxu0 0.0
    %1431 = vmatpush2.msra.mxu0 0.0
    %1432 = vmatprep.subr.mxu0 0.0
    %1433 = vmatpush2.msra.mxu0 0.0
    %1434 = vmatprep.subr.mxu0 0.0
    %1435 = vmatpush2.msra.mxu0 0.0
    %1436 = vmatprep.subr.mxu0 0.0
    %1437 = vmatpush2.msra.mxu0 0.0
    %1438 = vmatprep.subr.mxu0 0.0
    %1439 = vmatpush2.msra.mxu0 0.0
    %1440 = vmatprep.subr.mxu0 0.0
    %1441 = vmatpush2.msra.mxu0 0.0
    %1442 = vmatprep.subr.mxu0 0.0
    %1443 = vmatpush2.msra.mxu0 0.0
    %1444 = vmatprep.subr.mxu0 0.0
    %1445 = vmatpush2.msra.mxu0 0.0
    %1446 = vmatprep.subr.mxu0 0.0
    %1447 = vmatpush2.msra.mxu0 0.0
    %1448 = vmatprep.subr.mxu0 0.0
    %1449 = vmatpush2.msra.mxu0 0.0
    %1450 = vmatprep.subr.mxu0 0.0
    %1451 = vmatpush2.msra.mxu0 0.0
    %1452 = vmatprep.subr.mxu0 0.0
    %1453 = vmatpush2.msra.mxu0 0.0
    %1454 = vmatprep.subr.mxu0 0.0
    %1455 = vmatpush2.msra.mxu0 0.0
    %1456 = vmatprep.subr.mxu0 0.0
    %1457 = vmatpush2.msra.mxu0 0.0
    %1458 = vmatprep.mubr.f32.mxu0 0.0
    %1459 = vmatmul.mubr.f32.gmra.mxu0 %v1392
    %v1460 = vpop.f32.mrf.mxu0
    %v1461 = vadd.f32 0.0, %v1460
    %v1462 = vpop.f32.mrf.mxu0
    %1463 = vdwg.mxu0
    %v1465 = vsel %vm1390, %v1383, 0
    %1467 = vmatprep.subr.mxu0 0.0
    %1468 = vmatpush1.msra.mxu0 0.0
    %1469 = vmatprep.subr.mxu0 0.0
    %1470 = vmatpush1.msra.mxu0 0.0
    %1471 = vmatprep.subr.mxu0 0.0
    %1472 = vmatpush1.msra.mxu0 0.0
    %1473 = vmatprep.subr.mxu0 0.0
    %1474 = vmatpush1.msra.mxu0 0.0
    %1475 = vmatprep.subr.mxu0 0.0
    %1476 = vmatpush1.msra.mxu0 0.0
    %1477 = vmatprep.subr.mxu0 0.0
    %1478 = vmatpush1.msra.mxu0 0.0
    %1479 = vmatprep.subr.mxu0 0.0
    %1480 = vmatpush1.msra.mxu0 0.0
    %1481 = vmatprep.subr.mxu0 0.0
    %1482 = vmatpush1.msra.mxu0 0.0
    %1483 = vmatprep.subr.mxu0 0.0
    %1484 = vmatpush1.msra.mxu0 0.0
    %1485 = vmatprep.subr.mxu0 0.0
    %1486 = vmatpush1.msra.mxu0 0.0
    %1487 = vmatprep.subr.mxu0 0.0
    %1488 = vmatpush1.msra.mxu0 0.0
    %1489 = vmatprep.subr.mxu0 0.0
    %1490 = vmatpush1.msra.mxu0 0.0
    %1491 = vmatprep.subr.mxu0 0.0
    %1492 = vmatpush1.msra.mxu0 0.0
    %1493 = vmatprep.subr.mxu0 0.0
    %1494 = vmatpush1.msra.mxu0 0.0
    %1495 = vmatprep.subr.mxu0 0.0
    %1496 = vmatpush1.msra.mxu0 0.0
    %1497 = vmatprep.subr.mxu0 0.0
    %1498 = vmatpush1.msra.mxu0 %v676
    %1499 = vmatprep.subr.mxu0 0.0
    %1500 = vmatpush2.msra.mxu0 0.0
    %1501 = vmatprep.subr.mxu0 0.0
    %1502 = vmatpush2.msra.mxu0 0.0
    %1503 = vmatprep.subr.mxu0 0.0
    %1504 = vmatpush2.msra.mxu0 0.0
    %1505 = vmatprep.subr.mxu0 0.0
    %1506 = vmatpush2.msra.mxu0 0.0
    %1507 = vmatprep.subr.mxu0 0.0
    %1508 = vmatpush2.msra.mxu0 0.0
    %1509 = vmatprep.subr.mxu0 0.0
    %1510 = vmatpush2.msra.mxu0 0.0
    %1511 = vmatprep.subr.mxu0 0.0
    %1512 = vmatpush2.msra.mxu0 0.0
    %1513 = vmatprep.subr.mxu0 0.0
    %1514 = vmatpush2.msra.mxu0 0.0
    %1515 = vmatprep.subr.mxu0 0.0
    %1516 = vmatpush2.msra.mxu0 0.0
    %1517 = vmatprep.subr.mxu0 0.0
    %1518 = vmatpush2.msra.mxu0 0.0
    %1519 = vmatprep.subr.mxu0 0.0
    %1520 = vmatpush2.msra.mxu0 0.0
    %1521 = vmatprep.subr.mxu0 0.0
    %1522 = vmatpush2.msra.mxu0 0.0
    %1523 = vmatprep.subr.mxu0 0.0
    %1524 = vmatpush2.msra.mxu0 0.0
    %1525 = vmatprep.subr.mxu0 0.0
    %1526 = vmatpush2.msra.mxu0 0.0
    %1527 = vmatprep.subr.mxu0 0.0
    %1528 = vmatpush2.msra.mxu0 0.0
    %1529 = vmatprep.subr.mxu0 0.0
    %1530 = vmatpush2.msra.mxu0 0.0
    %1531 = vmatprep.mubr.f32.mxu0 0.0
    %1532 = vmatmul.mubr.f32.gmra.mxu0 %v1465
    %v1533 = vpop.f32.mrf.mxu0
    %v1534 = vadd.f32 0.0, %v1533
    %v1535 = vpop.f32.mrf.mxu0
    %1536 = vdwg.mxu0
    %v1538 = vsel %vm1390, %v1384, 0
    %1540 = vmatprep.subr.mxu0 0.0
    %1541 = vmatpush1.msra.mxu0 0.0
    %1542 = vmatprep.subr.mxu0 0.0
    %1543 = vmatpush1.msra.mxu0 0.0
    %1544 = vmatprep.subr.mxu0 0.0
    %1545 = vmatpush1.msra.mxu0 0.0
    %1546 = vmatprep.subr.mxu0 0.0
    %1547 = vmatpush1.msra.mxu0 0.0
    %1548 = vmatprep.subr.mxu0 0.0
    %1549 = vmatpush1.msra.mxu0 0.0
    %1550 = vmatprep.subr.mxu0 0.0
    %1551 = vmatpush1.msra.mxu0 0.0
    %1552 = vmatprep.subr.mxu0 0.0
    %1553 = vmatpush1.msra.mxu0 0.0
    %1554 = vmatprep.subr.mxu0 0.0
    %1555 = vmatpush1.msra.mxu0 0.0
    %1556 = vmatprep.subr.mxu0 0.0
    %1557 = vmatpush1.msra.mxu0 0.0
    %1558 = vmatprep.subr.mxu0 0.0
    %1559 = vmatpush1.msra.mxu0 0.0
    %1560 = vmatprep.subr.mxu0 0.0
    %1561 = vmatpush1.msra.mxu0 0.0
    %1562 = vmatprep.subr.mxu0 0.0
    %1563 = vmatpush1.msra.mxu0 0.0
    %1564 = vmatprep.subr.mxu0 0.0
    %1565 = vmatpush1.msra.mxu0 0.0
    %1566 = vmatprep.subr.mxu0 0.0
    %1567 = vmatpush1.msra.mxu0 0.0
    %1568 = vmatprep.subr.mxu0 0.0
    %1569 = vmatpush1.msra.mxu0 0.0
    %1570 = vmatprep.subr.mxu0 0.0
    %1571 = vmatpush1.msra.mxu0 %v677
    %1572 = vmatprep.subr.mxu0 0.0
    %1573 = vmatpush2.msra.mxu0 0.0
    %1574 = vmatprep.subr.mxu0 0.0
    %1575 = vmatpush2.msra.mxu0 0.0
    %1576 = vmatprep.subr.mxu0 0.0
    %1577 = vmatpush2.msra.mxu0 0.0
    %1578 = vmatprep.subr.mxu0 0.0
    %1579 = vmatpush2.msra.mxu0 0.0
    %1580 = vmatprep.subr.mxu0 0.0
    %1581 = vmatpush2.msra.mxu0 0.0
    %1582 = vmatprep.subr.mxu0 0.0
    %1583 = vmatpush2.msra.mxu0 0.0
    %1584 = vmatprep.subr.mxu0 0.0
    %1585 = vmatpush2.msra.mxu0 0.0
    %1586 = vmatprep.subr.mxu0 0.0
    %1587 = vmatpush2.msra.mxu0 0.0
    %1588 = vmatprep.subr.mxu0 0.0
    %1589 = vmatpush2.msra.mxu0 0.0
    %1590 = vmatprep.subr.mxu0 0.0
    %1591 = vmatpush2.msra.mxu0 0.0
    %1592 = vmatprep.subr.mxu0 0.0
    %1593 = vmatpush2.msra.mxu0 0.0
    %1594 = vmatprep.subr.mxu0 0.0
    %1595 = vmatpush2.msra.mxu0 0.0
    %1596 = vmatprep.subr.mxu0 0.0
    %1597 = vmatpush2.msra.mxu0 0.0
    %1598 = vmatprep.subr.mxu0 0.0
    %1599 = vmatpush2.msra.mxu0 0.0
    %1600 = vmatprep.subr.mxu0 0.0
    %1601 = vmatpush2.msra.mxu0 0.0
    %1602 = vmatprep.subr.mxu0 0.0
    %1603 = vmatpush2.msra.mxu0 0.0
    %1604 = vmatprep.mubr.f32.mxu0 0.0
    %1605 = vmatmul.mubr.f32.gmra.mxu0 %v1538
    %v1606 = vpop.f32.mrf.mxu0
    %v1607 = vadd.f32 0.0, %v1606
    %v1608 = vpop.f32.mrf.mxu0
    %1609 = vdwg.mxu0
    %v1611 = vsel %vm1390, %v1385, 0
    %1613 = vmatprep.subr.mxu0 0.0
    %1614 = vmatpush1.msra.mxu0 0.0
    %1615 = vmatprep.subr.mxu0 0.0
    %1616 = vmatpush1.msra.mxu0 0.0
    %1617 = vmatprep.subr.mxu0 0.0
    %1618 = vmatpush1.msra.mxu0 0.0
    %1619 = vmatprep.subr.mxu0 0.0
    %1620 = vmatpush1.msra.mxu0 0.0
    %1621 = vmatprep.subr.mxu0 0.0
    %1622 = vmatpush1.msra.mxu0 0.0
    %1623 = vmatprep.subr.mxu0 0.0
    %1624 = vmatpush1.msra.mxu0 0.0
    %1625 = vmatprep.subr.mxu0 0.0
    %1626 = vmatpush1.msra.mxu0 0.0
    %1627 = vmatprep.subr.mxu0 0.0
    %1628 = vmatpush1.msra.mxu0 0.0
    %1629 = vmatprep.subr.mxu0 0.0
    %1630 = vmatpush1.msra.mxu0 0.0
    %1631 = vmatprep.subr.mxu0 0.0
    %1632 = vmatpush1.msra.mxu0 0.0
    %1633 = vmatprep.subr.mxu0 0.0
    %1634 = vmatpush1.msra.mxu0 0.0
    %1635 = vmatprep.subr.mxu0 0.0
    %1636 = vmatpush1.msra.mxu0 0.0
    %1637 = vmatprep.subr.mxu0 0.0
    %1638 = vmatpush1.msra.mxu0 0.0
    %1639 = vmatprep.subr.mxu0 0.0
    %1640 = vmatpush1.msra.mxu0 0.0
    %1641 = vmatprep.subr.mxu0 0.0
    %1642 = vmatpush1.msra.mxu0 0.0
    %1643 = vmatprep.subr.mxu0 0.0
    %1644 = vmatpush1.msra.mxu0 %v678
    %1645 = vmatprep.subr.mxu0 0.0
    %1646 = vmatpush2.msra.mxu0 0.0
    %1647 = vmatprep.subr.mxu0 0.0
    %1648 = vmatpush2.msra.mxu0 0.0
    %1649 = vmatprep.subr.mxu0 0.0
    %1650 = vmatpush2.msra.mxu0 0.0
    %1651 = vmatprep.subr.mxu0 0.0
    %1652 = vmatpush2.msra.mxu0 0.0
    %1653 = vmatprep.subr.mxu0 0.0
    %1654 = vmatpush2.msra.mxu0 0.0
    %1655 = vmatprep.subr.mxu0 0.0
    %1656 = vmatpush2.msra.mxu0 0.0
    %1657 = vmatprep.subr.mxu0 0.0
    %1658 = vmatpush2.msra.mxu0 0.0
    %1659 = vmatprep.subr.mxu0 0.0
    %1660 = vmatpush2.msra.mxu0 0.0
    %1661 = vmatprep.subr.mxu0 0.0
    %1662 = vmatpush2.msra.mxu0 0.0
    %1663 = vmatprep.subr.mxu0 0.0
    %1664 = vmatpush2.msra.mxu0 0.0
    %1665 = vmatprep.subr.mxu0 0.0
    %1666 = vmatpush2.msra.mxu0 0.0
    %1667 = vmatprep.subr.mxu0 0.0
    %1668 = vmatpush2.msra.mxu0 0.0
    %1669 = vmatprep.subr.mxu0 0.0
    %1670 = vmatpush2.msra.mxu0 0.0
    %1671 = vmatprep.subr.mxu0 0.0
    %1672 = vmatpush2.msra.mxu0 0.0
    %1673 = vmatprep.subr.mxu0 0.0
    %1674 = vmatpush2.msra.mxu0 0.0
    %1675 = vmatprep.subr.mxu0 0.0
    %1676 = vmatpush2.msra.mxu0 0.0
    %1677 = vmatprep.mubr.f32.mxu0 0.0
    %1678 = vmatmul.mubr.f32.gmra.mxu0 %v1611
    %v1679 = vpop.f32.mrf.mxu0
    %v1680 = vadd.f32 0.0, %v1679
    %v1681 = vpop.f32.mrf.mxu0
    %1682 = vdwg.mxu0
    %v1684 = vsel %vm1390, %v1386, 0
    %1686 = vmatprep.subr.mxu0 0.0
    %1687 = vmatpush1.msra.mxu0 0.0
    %1688 = vmatprep.subr.mxu0 0.0
    %1689 = vmatpush1.msra.mxu0 0.0
    %1690 = vmatprep.subr.mxu0 0.0
    %1691 = vmatpush1.msra.mxu0 0.0
    %1692 = vmatprep.subr.mxu0 0.0
    %1693 = vmatpush1.msra.mxu0 0.0
    %1694 = vmatprep.subr.mxu0 0.0
    %1695 = vmatpush1.msra.mxu0 0.0
    %1696 = vmatprep.subr.mxu0 0.0
    %1697 = vmatpush1.msra.mxu0 0.0
    %1698 = vmatprep.subr.mxu0 0.0
    %1699 = vmatpush1.msra.mxu0 0.0
    %1700 = vmatprep.subr.mxu0 0.0
    %1701 = vmatpush1.msra.mxu0 0.0
    %1702 = vmatprep.subr.mxu0 0.0
    %1703 = vmatpush1.msra.mxu0 0.0
    %1704 = vmatprep.subr.mxu0 0.0
    %1705 = vmatpush1.msra.mxu0 0.0
    %1706 = vmatprep.subr.mxu0 0.0
    %1707 = vmatpush1.msra.mxu0 0.0
    %1708 = vmatprep.subr.mxu0 0.0
    %1709 = vmatpush1.msra.mxu0 0.0
    %1710 = vmatprep.subr.mxu0 0.0
    %1711 = vmatpush1.msra.mxu0 0.0
    %1712 = vmatprep.subr.mxu0 0.0
    %1713 = vmatpush1.msra.mxu0 0.0
    %1714 = vmatprep.subr.mxu0 0.0
    %1715 = vmatpush1.msra.mxu0 0.0
    %1716 = vmatprep.subr.mxu0 0.0
    %1717 = vmatpush1.msra.mxu0 %v679
    %1718 = vmatprep.subr.mxu0 0.0
    %1719 = vmatpush2.msra.mxu0 0.0
    %1720 = vmatprep.subr.mxu0 0.0
    %1721 = vmatpush2.msra.mxu0 0.0
    %1722 = vmatprep.subr.mxu0 0.0
    %1723 = vmatpush2.msra.mxu0 0.0
    %1724 = vmatprep.subr.mxu0 0.0
    %1725 = vmatpush2.msra.mxu0 0.0
    %1726 = vmatprep.subr.mxu0 0.0
    %1727 = vmatpush2.msra.mxu0 0.0
    %1728 = vmatprep.subr.mxu0 0.0
    %1729 = vmatpush2.msra.mxu0 0.0
    %1730 = vmatprep.subr.mxu0 0.0
    %1731 = vmatpush2.msra.mxu0 0.0
    %1732 = vmatprep.subr.mxu0 0.0
    %1733 = vmatpush2.msra.mxu0 0.0
    %1734 = vmatprep.subr.mxu0 0.0
    %1735 = vmatpush2.msra.mxu0 0.0
    %1736 = vmatprep.subr.mxu0 0.0
    %1737 = vmatpush2.msra.mxu0 0.0
    %1738 = vmatprep.subr.mxu0 0.0
    %1739 = vmatpush2.msra.mxu0 0.0
    %1740 = vmatprep.subr.mxu0 0.0
    %1741 = vmatpush2.msra.mxu0 0.0
    %1742 = vmatprep.subr.mxu0 0.0
    %1743 = vmatpush2.msra.mxu0 0.0
    %1744 = vmatprep.subr.mxu0 0.0
    %1745 = vmatpush2.msra.mxu0 0.0
    %1746 = vmatprep.subr.mxu0 0.0
    %1747 = vmatpush2.msra.mxu0 0.0
    %1748 = vmatprep.subr.mxu0 0.0
    %1749 = vmatpush2.msra.mxu0 0.0
    %1750 = vmatprep.mubr.f32.mxu0 0.0
    %1751 = vmatmul.mubr.f32.gmra.mxu0 %v1684
    %v1752 = vpop.f32.mrf.mxu0
    %v1753 = vadd.f32 0.0, %v1752
    %v1754 = vpop.f32.mrf.mxu0
    %1755 = vdwg.mxu0
    %v1757 = vsel %vm1390, %v1387, 0
    %1759 = vmatprep.subr.mxu0 0.0
    %1760 = vmatpush1.msra.mxu0 0.0
    %1761 = vmatprep.subr.mxu0 0.0
    %1762 = vmatpush1.msra.mxu0 0.0
    %1763 = vmatprep.subr.mxu0 0.0
    %1764 = vmatpush1.msra.mxu0 0.0
    %1765 = vmatprep.subr.mxu0 0.0
    %1766 = vmatpush1.msra.mxu0 0.0
    %1767 = vmatprep.subr.mxu0 0.0
    %1768 = vmatpush1.msra.mxu0 0.0
    %1769 = vmatprep.subr.mxu0 0.0
    %1770 = vmatpush1.msra.mxu0 0.0
    %1771 = vmatprep.subr.mxu0 0.0
    %1772 = vmatpush1.msra.mxu0 0.0
    %1773 = vmatprep.subr.mxu0 0.0
    %1774 = vmatpush1.msra.mxu0 0.0
    %1775 = vmatprep.subr.mxu0 0.0
    %1776 = vmatpush1.msra.mxu0 0.0
    %1777 = vmatprep.subr.mxu0 0.0
    %1778 = vmatpush1.msra.mxu0 0.0
    %1779 = vmatprep.subr.mxu0 0.0
    %1780 = vmatpush1.msra.mxu0 0.0
    %1781 = vmatprep.subr.mxu0 0.0
    %1782 = vmatpush1.msra.mxu0 0.0
    %1783 = vmatprep.subr.mxu0 0.0
    %1784 = vmatpush1.msra.mxu0 0.0
    %1785 = vmatprep.subr.mxu0 0.0
    %1786 = vmatpush1.msra.mxu0 0.0
    %1787 = vmatprep.subr.mxu0 0.0
    %1788 = vmatpush1.msra.mxu0 0.0
    %1789 = vmatprep.subr.mxu0 0.0
    %1790 = vmatpush1.msra.mxu0 %v680
    %1791 = vmatprep.subr.mxu0 0.0
    %1792 = vmatpush2.msra.mxu0 0.0
    %1793 = vmatprep.subr.mxu0 0.0
    %1794 = vmatpush2.msra.mxu0 0.0
    %1795 = vmatprep.subr.mxu0 0.0
    %1796 = vmatpush2.msra.mxu0 0.0
    %1797 = vmatprep.subr.mxu0 0.0
    %1798 = vmatpush2.msra.mxu0 0.0
    %1799 = vmatprep.subr.mxu0 0.0
    %1800 = vmatpush2.msra.mxu0 0.0
    %1801 = vmatprep.subr.mxu0 0.0
    %1802 = vmatpush2.msra.mxu0 0.0
    %1803 = vmatprep.subr.mxu0 0.0
    %1804 = vmatpush2.msra.mxu0 0.0
    %1805 = vmatprep.subr.mxu0 0.0
    %1806 = vmatpush2.msra.mxu0 0.0
    %1807 = vmatprep.subr.mxu0 0.0
    %1808 = vmatpush2.msra.mxu0 0.0
    %1809 = vmatprep.subr.mxu0 0.0
    %1810 = vmatpush2.msra.mxu0 0.0
    %1811 = vmatprep.subr.mxu0 0.0
    %1812 = vmatpush2.msra.mxu0 0.0
    %1813 = vmatprep.subr.mxu0 0.0
    %1814 = vmatpush2.msra.mxu0 0.0
    %1815 = vmatprep.subr.mxu0 0.0
    %1816 = vmatpush2.msra.mxu0 0.0
    %1817 = vmatprep.subr.mxu0 0.0
    %1818 = vmatpush2.msra.mxu0 0.0
    %1819 = vmatprep.subr.mxu0 0.0
    %1820 = vmatpush2.msra.mxu0 0.0
    %1821 = vmatprep.subr.mxu0 0.0
    %1822 = vmatpush2.msra.mxu0 0.0
    %1823 = vmatprep.mubr.f32.mxu0 0.0
    %1824 = vmatmul.mubr.f32.gmra.mxu0 %v1757
    %v1825 = vpop.f32.mrf.mxu0
    %v1826 = vadd.f32 0.0, %v1825
    %v1827 = vpop.f32.mrf.mxu0
    %1828 = vdwg.mxu0
    %v1830 = vsel %vm1390, %v1388, 0
    %1832 = vmatprep.subr.mxu0 0.0
    %1833 = vmatpush1.msra.mxu0 0.0
    %1834 = vmatprep.subr.mxu0 0.0
    %1835 = vmatpush1.msra.mxu0 0.0
    %1836 = vmatprep.subr.mxu0 0.0
    %1837 = vmatpush1.msra.mxu0 0.0
    %1838 = vmatprep.subr.mxu0 0.0
    %1839 = vmatpush1.msra.mxu0 0.0
    %1840 = vmatprep.subr.mxu0 0.0
    %1841 = vmatpush1.msra.mxu0 0.0
    %1842 = vmatprep.subr.mxu0 0.0
    %1843 = vmatpush1.msra.mxu0 0.0
    %1844 = vmatprep.subr.mxu0 0.0
    %1845 = vmatpush1.msra.mxu0 0.0
    %1846 = vmatprep.subr.mxu0 0.0
    %1847 = vmatpush1.msra.mxu0 0.0
    %1848 = vmatprep.subr.mxu0 0.0
    %1849 = vmatpush1.msra.mxu0 0.0
    %1850 = vmatprep.subr.mxu0 0.0
    %1851 = vmatpush1.msra.mxu0 0.0
    %1852 = vmatprep.subr.mxu0 0.0
    %1853 = vmatpush1.msra.mxu0 0.0
    %1854 = vmatprep.subr.mxu0 0.0
    %1855 = vmatpush1.msra.mxu0 0.0
    %1856 = vmatprep.subr.mxu0 0.0
    %1857 = vmatpush1.msra.mxu0 0.0
    %1858 = vmatprep.subr.mxu0 0.0
    %1859 = vmatpush1.msra.mxu0 0.0
    %1860 = vmatprep.subr.mxu0 0.0
    %1861 = vmatpush1.msra.mxu0 0.0
    %1862 = vmatprep.subr.mxu0 0.0
    %1863 = vmatpush1.msra.mxu0 %v681
    %1864 = vmatprep.subr.mxu0 0.0
    %1865 = vmatpush2.msra.mxu0 0.0
    %1866 = vmatprep.subr.mxu0 0.0
    %1867 = vmatpush2.msra.mxu0 0.0
    %1868 = vmatprep.subr.mxu0 0.0
    %1869 = vmatpush2.msra.mxu0 0.0
    %1870 = vmatprep.subr.mxu0 0.0
    %1871 = vmatpush2.msra.mxu0 0.0
    %1872 = vmatprep.subr.mxu0 0.0
    %1873 = vmatpush2.msra.mxu0 0.0
    %1874 = vmatprep.subr.mxu0 0.0
    %1875 = vmatpush2.msra.mxu0 0.0
    %1876 = vmatprep.subr.mxu0 0.0
    %1877 = vmatpush2.msra.mxu0 0.0
    %1878 = vmatprep.subr.mxu0 0.0
    %1879 = vmatpush2.msra.mxu0 0.0
    %1880 = vmatprep.subr.mxu0 0.0
    %1881 = vmatpush2.msra.mxu0 0.0
    %1882 = vmatprep.subr.mxu0 0.0
    %1883 = vmatpush2.msra.mxu0 0.0
    %1884 = vmatprep.subr.mxu0 0.0
    %1885 = vmatpush2.msra.mxu0 0.0
    %1886 = vmatprep.subr.mxu0 0.0
    %1887 = vmatpush2.msra.mxu0 0.0
    %1888 = vmatprep.subr.mxu0 0.0
    %1889 = vmatpush2.msra.mxu0 0.0
    %1890 = vmatprep.subr.mxu0 0.0
    %1891 = vmatpush2.msra.mxu0 0.0
    %1892 = vmatprep.subr.mxu0 0.0
    %1893 = vmatpush2.msra.mxu0 0.0
    %1894 = vmatprep.subr.mxu0 0.0
    %1895 = vmatpush2.msra.mxu0 0.0
    %1896 = vmatprep.mubr.f32.mxu0 0.0
    %1897 = vmatmul.mubr.f32.gmra.mxu0 %v1830
    %v1898 = vpop.f32.mrf.mxu0
    %v1899 = vadd.f32 0.0, %v1898
    %v1900 = vpop.f32.mrf.mxu0
    %1901 = vdwg.mxu0
    %v1903 = vsel %vm1390, %v1389, 0
    %1905 = vmatprep.subr.mxu0 0.0
    %1906 = vmatpush1.msra.mxu0 0.0
    %1907 = vmatprep.subr.mxu0 0.0
    %1908 = vmatpush1.msra.mxu0 0.0
    %1909 = vmatprep.subr.mxu0 0.0
    %1910 = vmatpush1.msra.mxu0 0.0
    %1911 = vmatprep.subr.mxu0 0.0
    %1912 = vmatpush1.msra.mxu0 0.0
    %1913 = vmatprep.subr.mxu0 0.0
    %1914 = vmatpush1.msra.mxu0 0.0
    %1915 = vmatprep.subr.mxu0 0.0
    %1916 = vmatpush1.msra.mxu0 0.0
    %1917 = vmatprep.subr.mxu0 0.0
    %1918 = vmatpush1.msra.mxu0 0.0
    %1919 = vmatprep.subr.mxu0 0.0
    %1920 = vmatpush1.msra.mxu0 0.0
    %1921 = vmatprep.subr.mxu0 0.0
    %1922 = vmatpush1.msra.mxu0 0.0
    %1923 = vmatprep.subr.mxu0 0.0
    %1924 = vmatpush1.msra.mxu0 0.0
    %1925 = vmatprep.subr.mxu0 0.0
    %1926 = vmatpush1.msra.mxu0 0.0
    %1927 = vmatprep.subr.mxu0 0.0
    %1928 = vmatpush1.msra.mxu0 0.0
    %1929 = vmatprep.subr.mxu0 0.0
    %1930 = vmatpush1.msra.mxu0 0.0
    %1931 = vmatprep.subr.mxu0 0.0
    %1932 = vmatpush1.msra.mxu0 0.0
    %1933 = vmatprep.subr.mxu0 0.0
    %1934 = vmatpush1.msra.mxu0 0.0
    %1935 = vmatprep.subr.mxu0 0.0
    %1936 = vmatpush1.msra.mxu0 %v682
    %1937 = vmatprep.subr.mxu0 0.0
    %1938 = vmatpush2.msra.mxu0 0.0
    %1939 = vmatprep.subr.mxu0 0.0
    %1940 = vmatpush2.msra.mxu0 0.0
    %1941 = vmatprep.subr.mxu0 0.0
    %1942 = vmatpush2.msra.mxu0 0.0
    %1943 = vmatprep.subr.mxu0 0.0
    %1944 = vmatpush2.msra.mxu0 0.0
    %1945 = vmatprep.subr.mxu0 0.0
    %1946 = vmatpush2.msra.mxu0 0.0
    %1947 = vmatprep.subr.mxu0 0.0
    %1948 = vmatpush2.msra.mxu0 0.0
    %1949 = vmatprep.subr.mxu0 0.0
    %1950 = vmatpush2.msra.mxu0 0.0
    %1951 = vmatprep.subr.mxu0 0.0
    %1952 = vmatpush2.msra.mxu0 0.0
    %1953 = vmatprep.subr.mxu0 0.0
    %1954 = vmatpush2.msra.mxu0 0.0
    %1955 = vmatprep.subr.mxu0 0.0
    %1956 = vmatpush2.msra.mxu0 0.0
    %1957 = vmatprep.subr.mxu0 0.0
    %1958 = vmatpush2.msra.mxu0 0.0
    %1959 = vmatprep.subr.mxu0 0.0
    %1960 = vmatpush2.msra.mxu0 0.0
    %1961 = vmatprep.subr.mxu0 0.0
    %1962 = vmatpush2.msra.mxu0 0.0
    %1963 = vmatprep.subr.mxu0 0.0
    %1964 = vmatpush2.msra.mxu0 0.0
    %1965 = vmatprep.subr.mxu0 0.0
    %1966 = vmatpush2.msra.mxu0 0.0
    %1967 = vmatprep.subr.mxu0 0.0
    %1968 = vmatpush2.msra.mxu0 0.0
    %1969 = vmatprep.mubr.f32.mxu0 0.0
    %1970 = vmatmul.mubr.f32.gmra.mxu0 %v1903
    %v1971 = vpop.f32.mrf.mxu0
    %v1972 = vadd.f32 0.0, %v1971
    %v1973 = vpop.f32.mrf.mxu0
    %1974 = vdwg.mxu0
    %v1975 = vld [vmem:[#allocation10] sm:$0xff]
    %v1976 = vld [vmem:[#allocation10 + $0x8] sm:$0xff]
    %v1977 = vld [vmem:[#allocation10 + $0x10] sm:$0xff]
    %v1978 = vld [vmem:[#allocation10 + $0x18] sm:$0xff]
    %v1979 = vld [vmem:[#allocation10 + $0x20] sm:$0xff]
    %v1980 = vld [vmem:[#allocation10 + $0x28] sm:$0xff]
    %v1981 = vld [vmem:[#allocation10 + $0x30] sm:$0xff]
    %v1982 = vld [vmem:[#allocation10 + $0x38] sm:$0xff]
    %v1983 = vld [vmem:[#allocation10 + $0x40] sm:$0xff]
    %v1984 = vld [vmem:[#allocation10 + $0x48] sm:$0xff]
    %v1985 = vld [vmem:[#allocation10 + $0x50] sm:$0xff]
    %v1986 = vld [vmem:[#allocation10 + $0x58] sm:$0xff]
    %v1987 = vld [vmem:[#allocation10 + $0x60] sm:$0xff]
    %v1988 = vld [vmem:[#allocation10 + $0x68] sm:$0xff]
    %v1989 = vld [vmem:[#allocation10 + $0x70] sm:$0xff]
    %v1990 = vld [vmem:[#allocation10 + $0x78] sm:$0xff]
    %v1991 = vld [vmem:[#allocation12] sm:$0xff]
    %v1992 = vld [vmem:[#allocation12 + $0x8] sm:$0xff]
    %v1993 = vld [vmem:[#allocation12 + $0x10] sm:$0xff]
    %v1994 = vld [vmem:[#allocation12 + $0x18] sm:$0xff]
    %v1995 = vld [vmem:[#allocation12 + $0x20] sm:$0xff]
    %v1996 = vld [vmem:[#allocation12 + $0x28] sm:$0xff]
    %v1997 = vld [vmem:[#allocation12 + $0x30] sm:$0xff]
    %v1998 = vld [vmem:[#allocation12 + $0x38] sm:$0xff]
    %v1999 = vld [vmem:[#allocation12 + $0x40] sm:$0xff]
    %v2000 = vld [vmem:[#allocation12 + $0x48] sm:$0xff]
    %v2001 = vld [vmem:[#allocation12 + $0x50] sm:$0xff]
    %v2002 = vld [vmem:[#allocation12 + $0x58] sm:$0xff]
    %v2003 = vld [vmem:[#allocation12 + $0x60] sm:$0xff]
    %v2004 = vld [vmem:[#allocation12 + $0x68] sm:$0xff]
    %v2005 = vld [vmem:[#allocation12 + $0x70] sm:$0xff]
    %v2006 = vld [vmem:[#allocation12 + $0x78] sm:$0xff]
    %v2015 = vrot.slane %v1534, 7
    %vm2016 = vcmask 1041409
    %v2017 = vsel %vm2016, %v2015, %v1461
    %v2018 = vrot.slane %v1607, 6
    %vm2019 = vcmask 1042434
    %v2020 = vsel %vm2019, %v2018, %v2017
    %v2021 = vrot.slane %v1680, 5
    %vm2022 = vcmask 1043459
    %v2023 = vsel %vm2022, %v2021, %v2020
    %v2024 = vrot.slane %v1753, 4
    %vm2025 = vcmask 1044484
    %v2026 = vsel %vm2025, %v2024, %v2023
    %v2027 = vrot.slane %v1826, 3
    %vm2028 = vcmask 1045509
    %v2029 = vsel %vm2028, %v2027, %v2026
    %v2030 = vrot.slane %v1899, 2
    %vm2031 = vcmask 1046534
    %v2032 = vsel %vm2031, %v2030, %v2029
    %v2033 = vrot.slane %v1972, 1
    %vm2034 = vcmask 1047559
    %v2035 = vsel %vm2034, %v2033, %v2032
    %2037 = vmatprep.subr.mxu0 0.0
    %2038 = vmatpush1.msra.mxu0 %v2006
    %2039 = vmatprep.subr.mxu0 0.0
    %2040 = vmatpush1.msra.mxu0 %v2005
    %2041 = vmatprep.subr.mxu0 0.0
    %2042 = vmatpush1.msra.mxu0 %v2004
    %2043 = vmatprep.subr.mxu0 0.0
    %2044 = vmatpush1.msra.mxu0 %v2003
    %2045 = vmatprep.subr.mxu0 0.0
    %2046 = vmatpush1.msra.mxu0 %v2002
    %2047 = vmatprep.subr.mxu0 0.0
    %2048 = vmatpush1.msra.mxu0 %v2001
    %2049 = vmatprep.subr.mxu0 0.0
    %2050 = vmatpush1.msra.mxu0 %v2000
    %2051 = vmatprep.subr.mxu0 0.0
    %2052 = vmatpush1.msra.mxu0 %v1999
    %2053 = vmatprep.subr.mxu0 0.0
    %2054 = vmatpush1.msra.mxu0 %v1998
    %2055 = vmatprep.subr.mxu0 0.0
    %2056 = vmatpush1.msra.mxu0 %v1997
    %2057 = vmatprep.subr.mxu0 0.0
    %2058 = vmatpush1.msra.mxu0 %v1996
    %2059 = vmatprep.subr.mxu0 0.0
    %2060 = vmatpush1.msra.mxu0 %v1995
    %2061 = vmatprep.subr.mxu0 0.0
    %2062 = vmatpush1.msra.mxu0 %v1994
    %2063 = vmatprep.subr.mxu0 0.0
    %2064 = vmatpush1.msra.mxu0 %v1993
    %2065 = vmatprep.subr.mxu0 0.0
    %2066 = vmatpush1.msra.mxu0 %v1992
    %2067 = vmatprep.subr.mxu0 0.0
    %2068 = vmatpush1.msra.mxu0 %v1991
    %2069 = vmatprep.subr.mxu0 0.0
    %2070 = vmatpush2.msra.mxu0 0.0
    %2071 = vmatprep.subr.mxu0 0.0
    %2072 = vmatpush2.msra.mxu0 0.0
    %2073 = vmatprep.subr.mxu0 0.0
    %2074 = vmatpush2.msra.mxu0 0.0
    %2075 = vmatprep.subr.mxu0 0.0
    %2076 = vmatpush2.msra.mxu0 0.0
    %2077 = vmatprep.subr.mxu0 0.0
    %2078 = vmatpush2.msra.mxu0 0.0
    %2079 = vmatprep.subr.mxu0 0.0
    %2080 = vmatpush2.msra.mxu0 0.0
    %2081 = vmatprep.subr.mxu0 0.0
    %2082 = vmatpush2.msra.mxu0 0.0
    %2083 = vmatprep.subr.mxu0 0.0
    %2084 = vmatpush2.msra.mxu0 0.0
    %2085 = vmatprep.subr.mxu0 0.0
    %2086 = vmatpush2.msra.mxu0 0.0
    %2087 = vmatprep.subr.mxu0 0.0
    %2088 = vmatpush2.msra.mxu0 0.0
    %2089 = vmatprep.subr.mxu0 0.0
    %2090 = vmatpush2.msra.mxu0 0.0
    %2091 = vmatprep.subr.mxu0 0.0
    %2092 = vmatpush2.msra.mxu0 0.0
    %2093 = vmatprep.subr.mxu0 0.0
    %2094 = vmatpush2.msra.mxu0 0.0
    %2095 = vmatprep.subr.mxu0 0.0
    %2096 = vmatpush2.msra.mxu0 0.0
    %2097 = vmatprep.subr.mxu0 0.0
    %2098 = vmatpush2.msra.mxu0 0.0
    %2099 = vmatprep.subr.mxu0 0.0
    %2100 = vmatpush2.msra.mxu0 0.0
    %2101 = vmatprep.mubr.f32.mxu0 0.0
    %2102 = vmatmul.mubr.f32.gmra.mxu0 %v2035
    %v2103 = vpop.f32.mrf.mxu0
    %v2104 = vadd.f32 0.0, %v2103
    %v2105 = vpop.f32.mrf.mxu0
    %2106 = vdwg.mxu0
    %2107 = vmatprep.subr.mxu0 0.0
    %2108 = vmatpush1.msra.mxu0 %v1990
    %2109 = vmatprep.subr.mxu0 0.0
    %2110 = vmatpush1.msra.mxu0 %v1989
    %2111 = vmatprep.subr.mxu0 0.0
    %2112 = vmatpush1.msra.mxu0 %v1988
    %2113 = vmatprep.subr.mxu0 0.0
    %2114 = vmatpush1.msra.mxu0 %v1987
    %2115 = vmatprep.subr.mxu0 0.0
    %2116 = vmatpush1.msra.mxu0 %v1986
    %2117 = vmatprep.subr.mxu0 0.0
    %2118 = vmatpush1.msra.mxu0 %v1985
    %2119 = vmatprep.subr.mxu0 0.0
    %2120 = vmatpush1.msra.mxu0 %v1984
    %2121 = vmatprep.subr.mxu0 0.0
    %2122 = vmatpush1.msra.mxu0 %v1983
    %2123 = vmatprep.subr.mxu0 0.0
    %2124 = vmatpush1.msra.mxu0 %v1982
    %2125 = vmatprep.subr.mxu0 0.0
    %2126 = vmatpush1.msra.mxu0 %v1981
    %2127 = vmatprep.subr.mxu0 0.0
    %2128 = vmatpush1.msra.mxu0 %v1980
    %2129 = vmatprep.subr.mxu0 0.0
    %2130 = vmatpush1.msra.mxu0 %v1979
    %2131 = vmatprep.subr.mxu0 0.0
    %2132 = vmatpush1.msra.mxu0 %v1978
    %2133 = vmatprep.subr.mxu0 0.0
    %2134 = vmatpush1.msra.mxu0 %v1977
    %2135 = vmatprep.subr.mxu0 0.0
    %2136 = vmatpush1.msra.mxu0 %v1976
    %2137 = vmatprep.subr.mxu0 0.0
    %2138 = vmatpush1.msra.mxu0 %v1975
    %2139 = vmatprep.subr.mxu0 0.0
    %2140 = vmatpush2.msra.mxu0 0.0
    %2141 = vmatprep.subr.mxu0 0.0
    %2142 = vmatpush2.msra.mxu0 0.0
    %2143 = vmatprep.subr.mxu0 0.0
    %2144 = vmatpush2.msra.mxu0 0.0
    %2145 = vmatprep.subr.mxu0 0.0
    %2146 = vmatpush2.msra.mxu0 0.0
    %2147 = vmatprep.subr.mxu0 0.0
    %2148 = vmatpush2.msra.mxu0 0.0
    %2149 = vmatprep.subr.mxu0 0.0
    %2150 = vmatpush2.msra.mxu0 0.0
    %2151 = vmatprep.subr.mxu0 0.0
    %2152 = vmatpush2.msra.mxu0 0.0
    %2153 = vmatprep.subr.mxu0 0.0
    %2154 = vmatpush2.msra.mxu0 0.0
    %2155 = vmatprep.subr.mxu0 0.0
    %2156 = vmatpush2.msra.mxu0 0.0
    %2157 = vmatprep.subr.mxu0 0.0
    %2158 = vmatpush2.msra.mxu0 0.0
    %2159 = vmatprep.subr.mxu0 0.0
    %2160 = vmatpush2.msra.mxu0 0.0
    %2161 = vmatprep.subr.mxu0 0.0
    %2162 = vmatpush2.msra.mxu0 0.0
    %2163 = vmatprep.subr.mxu0 0.0
    %2164 = vmatpush2.msra.mxu0 0.0
    %2165 = vmatprep.subr.mxu0 0.0
    %2166 = vmatpush2.msra.mxu0 0.0
    %2167 = vmatprep.subr.mxu0 0.0
    %2168 = vmatpush2.msra.mxu0 0.0
    %2169 = vmatprep.subr.mxu0 0.0
    %2170 = vmatpush2.msra.mxu0 0.0
    %2171 = vmatprep.mubr.f32.mxu0 0.0
    %2172 = vmatmul.mubr.f32.gmra.mxu0 %v673
    %v2173 = vpop.f32.mrf.mxu0
    %v2174 = vadd.f32 %v2104, %v2173
    %v2175 = vpop.f32.mrf.mxu0
    %2176 = vdwg.mxu0
    %v2177 = vld [vmem:[#allocation13] sm:$0x1]
    %v2179 = vlaneseq
    %v2180 = vshrl.u32 %v2179, 7
    %v2181 = vsub.s32 0, %v2180
    %v2182 = vrot.slane %v2177, %v2181
    %v2184 = vadd.f32 %v2174, %v2182
    %v2185 = vtanh.pop %v2184
    %v2186 = vld [vmem:[%s11] sm:$0xff]
    %v2187 = vld [vmem:[%s11 + $0x8] sm:$0xff]
    %v2188 = vld [vmem:[%s11 + $0x10] sm:$0xff]
    %v2189 = vld [vmem:[%s11 + $0x18] sm:$0xff]
    %v2190 = vld [vmem:[%s11 + $0x20] sm:$0xff]
    %v2191 = vld [vmem:[%s11 + $0x28] sm:$0xff]
    %v2192 = vld [vmem:[%s11 + $0x30] sm:$0xff]
    %v2193 = vld [vmem:[%s11 + $0x38] sm:$0xff]
    %v2194 = vld [vmem:[%s11 + $0x40] sm:$0xff]
    %v2195 = vld [vmem:[%s11 + $0x48] sm:$0xff]
    %v2196 = vld [vmem:[%s11 + $0x50] sm:$0xff]
    %v2197 = vld [vmem:[%s11 + $0x58] sm:$0xff]
    %v2198 = vld [vmem:[%s11 + $0x60] sm:$0xff]
    %v2199 = vld [vmem:[%s11 + $0x68] sm:$0xff]
    %v2200 = vld [vmem:[%s11 + $0x70] sm:$0xff]
    %v2201 = vld [vmem:[%s11 + $0x78] sm:$0xff]
    %v2202 = vld [vmem:[%s12] sm:$0x1]
    %v2204 = vlaneseq
    %v2205 = vshrl.u32 %v2204, 7
    %v2206 = vsub.s32 0, %v2205
    %v2207 = vrot.slane %v2202, %v2206
    %2209 = vmatprep.subr.mxu0 0.0
    %2210 = vmatpush1.msra.mxu0 %v2201
    %2211 = vmatprep.subr.mxu0 0.0
    %2212 = vmatpush1.msra.mxu0 %v2200
    %2213 = vmatprep.subr.mxu0 0.0
    %2214 = vmatpush1.msra.mxu0 %v2199
    %2215 = vmatprep.subr.mxu0 0.0
    %2216 = vmatpush1.msra.mxu0 %v2198
    %2217 = vmatprep.subr.mxu0 0.0
    %2218 = vmatpush1.msra.mxu0 %v2197
    %2219 = vmatprep.subr.mxu0 0.0
    %2220 = vmatpush1.msra.mxu0 %v2196
    %2221 = vmatprep.subr.mxu0 0.0
    %2222 = vmatpush1.msra.mxu0 %v2195
    %2223 = vmatprep.subr.mxu0 0.0
    %2224 = vmatpush1.msra.mxu0 %v2194
    %2225 = vmatprep.subr.mxu0 0.0
    %2226 = vmatpush1.msra.mxu0 %v2193
    %2227 = vmatprep.subr.mxu0 0.0
    %2228 = vmatpush1.msra.mxu0 %v2192
    %2229 = vmatprep.subr.mxu0 0.0
    %2230 = vmatpush1.msra.mxu0 %v2191
    %2231 = vmatprep.subr.mxu0 0.0
    %2232 = vmatpush1.msra.mxu0 %v2190
    %2233 = vmatprep.subr.mxu0 0.0
    %2234 = vmatpush1.msra.mxu0 %v2189
    %2235 = vmatprep.subr.mxu0 0.0
    %2236 = vmatpush1.msra.mxu0 %v2188
    %2237 = vmatprep.subr.mxu0 0.0
    %2238 = vmatpush1.msra.mxu0 %v2187
    %2239 = vmatprep.subr.mxu0 0.0
    %2240 = vmatpush1.msra.mxu0 %v2186
    %2241 = vmatprep.subr.mxu0 0.0
    %2242 = vmatpush2.msra.mxu0 0.0
    %2243 = vmatprep.subr.mxu0 0.0
    %2244 = vmatpush2.msra.mxu0 0.0
    %2245 = vmatprep.subr.mxu0 0.0
    %2246 = vmatpush2.msra.mxu0 0.0
    %2247 = vmatprep.subr.mxu0 0.0
    %2248 = vmatpush2.msra.mxu0 0.0
    %2249 = vmatprep.subr.mxu0 0.0
    %2250 = vmatpush2.msra.mxu0 0.0
    %2251 = vmatprep.subr.mxu0 0.0
    %2252 = vmatpush2.msra.mxu0 0.0
    %2253 = vmatprep.subr.mxu0 0.0
    %2254 = vmatpush2.msra.mxu0 0.0
    %2255 = vmatprep.subr.mxu0 0.0
    %2256 = vmatpush2.msra.mxu0 0.0
    %2257 = vmatprep.subr.mxu0 0.0
    %2258 = vmatpush2.msra.mxu0 0.0
    %2259 = vmatprep.subr.mxu0 0.0
    %2260 = vmatpush2.msra.mxu0 0.0
    %2261 = vmatprep.subr.mxu0 0.0
    %2262 = vmatpush2.msra.mxu0 0.0
    %2263 = vmatprep.subr.mxu0 0.0
    %2264 = vmatpush2.msra.mxu0 0.0
    %2265 = vmatprep.subr.mxu0 0.0
    %2266 = vmatpush2.msra.mxu0 0.0
    %2267 = vmatprep.subr.mxu0 0.0
    %2268 = vmatpush2.msra.mxu0 0.0
    %2269 = vmatprep.subr.mxu0 0.0
    %2270 = vmatpush2.msra.mxu0 0.0
    %2271 = vmatprep.subr.mxu0 0.0
    %2272 = vmatpush2.msra.mxu0 0.0
    %2273 = vmatprep.mubr.f32.mxu0 0.0
    %2274 = vmatmul.mubr.f32.gmra.mxu0 %v2185
    %v2275 = vpop.f32.mrf.mxu0
    %v2276 = vadd.f32 %v2207, %v2275
    %v2277 = vpop.f32.mrf.mxu0
    %2278 = vdwg.mxu0
    %2279 = vmax.xlane.f32.xlu0 %v2276
    %v2280 = vpop.xlane.xlu0 %2279
    %v2281 = vsub.f32 %v2276, %v2280
    %v2282 = vmul.f32 %v2281, 1.442695
    %v2283 = vpow.pop %v2282
    %2284 = vadd.xlane.f32.xlu0 %v2283
    %v2285 = vpop.xlane.xlu0 %2284
    %v2286 = vlog2.pop %v2285
    %v2287 = vmul.f32 %v2286, 0.6931472
    %v2288 = vsub.f32 %v2281, %v2287
    %2289 = vst [vmem:[%s13] sm:$0xff] %v2288
    // Predicated region
    $region86: #{_lambda_.1} parent=1 // pred_check
      _
    $region87: #{_lambda_.1} parent=1 // pred_check_branch
      %2291 = sbr.rel (0) target = $region89
    $region88: #{_lambda_.1} parent=1 // pred_region
      _
    $region89: #{_lambda_.1} parent=1 // pred_fallthru
      _
    // Predicated region
    $region90: #{_lambda_.1} parent=1 // pred_check
      _
    $region91: #{_lambda_.1} parent=1 // pred_check_branch
      %2293 = sbr.rel (0) target = $region93
    $region92: #{_lambda_.1} parent=1 // pred_region
      _
    $region93: #{_lambda_.1} parent=1 // pred_fallthru
      _
    // Predicated region
    $region94: #{_lambda_.1} parent=1 // pred_check
      _
    $region95: #{_lambda_.1} parent=1 // pred_check_branch
      %2295 = sbr.rel (0) target = $region97
    $region96: #{_lambda_.1} parent=1 // pred_region
      _
    $region97: #{_lambda_.1} parent=1 // pred_fallthru
      _
    // Predicated region
    $region98: #{_lambda_.1} parent=1 // pred_check
      _
    $region99: #{_lambda_.1} parent=1 // pred_check_branch
      %2297 = sbr.rel (0) target = $region101
    $region100: #{_lambda_.1} parent=1 // pred_region
      _
    $region101: #{_lambda_.1} parent=1 // pred_fallthru
      _
    %2298 = vsyncpa [#allocation3], 1
    %2299 = vsyncpa [#allocation5], 1
    %2300 = vsyncpa [#allocation8], 1
    %2301 = vsyncpa [#allocation11], 1
    %2302 = vsyncpa [#allocation14], 1

</llo_original>
